<compile_context>
chip_gen: v5e
topology: v5e:2x2
jax: 0.10.0
libtpu: 0.0.40
codegen_flags: <defaults>
</compile_context>

<pallas_src>
import functools
import math

import jax
import jax.numpy as jnp
from jax.experimental import pallas as pl
from jax.experimental.pallas import tpu as pltpu

# ----------------------------- model dimensions -----------------------------
B, C, H, W = 2, 4, 16, 16     # batch, in-channels, spatial
N = H * W                     # spatial positions per image (lane axis)
BN = B * N                    # batch merged onto lanes (512)
D = 32                        # token embedding dim
HID = 64                      # backbone MLP hidden dim
T = 16                        # number of learned tokens
K = 8                         # number of segmentation classes
SCALE = 1.0 / math.sqrt(D)

# ------------------- bf16 weight slab layout (rows, 128) ---------------------
Q_R = 0          # (T, D)    query tokens
W1A_R = 16       # (HID, D)
W2A_R = 80       # (D, HID)
W1B_R = 112      # (HID, D)
W2B_R = 176      # (D, HID)
WD_R = 208       # (D, D)
WC_R = 240       # (K, D)
W_ROWS, W_COLS = 256, 128     # rows padded to bf16 (16,128) granule

# ------------------- f32 slab layout (rows, 8): VPU-side params -------------
WP_R = 0         # (D, C) input projection (used on VPU)
B1A_R = 32       # (HID, 1)
B2A_R = 96       # (D, 1)
B1B_R = 128      # (HID, 1)
B2B_R = 192      # (D, 1)
BD_R = 224       # (D, 1)
BC_R = 256       # (K, 1)
F_ROWS, F_COLS = 264, 8


# ------------------------------ fused kernel ---------------------------------
def _forward_kernel(x_ref, w_ref, f_ref, out_ref):
    # ---- one-time static slab slicing (all row offsets tile-aligned) -------
    q = w_ref[Q_R:Q_R + T, 0:D]                     # bf16 (T, D)
    w1a = w_ref[W1A_R:W1A_R + HID, 0:D]             # bf16 (HID, D)
    w2a = w_ref[W2A_R:W2A_R + D, 0:HID]             # bf16 (D, HID)
    w1b = w_ref[W1B_R:W1B_R + HID, 0:D]
    w2b = w_ref[W2B_R:W2B_R + D, 0:HID]
    wd = w_ref[WD_R:WD_R + D, 0:D]                  # bf16 (D, D)
    wc = w_ref[WC_R:WC_R + K, 0:D]                  # bf16 (K, D)

    wp = f_ref[WP_R:WP_R + D, 0:C]                  # f32 (D, C)
    b1a = f_ref[B1A_R:B1A_R + HID, 0:1]             # f32 (HID, 1)
    b2a = f_ref[B2A_R:B2A_R + D, 0:1]
    b1b = f_ref[B1B_R:B1B_R + HID, 0:1]
    b2b = f_ref[B2B_R:B2B_R + D, 0:1]
    bd = f_ref[BD_R:BD_R + D, 0:1]
    bc = f_ref[BC_R:BC_R + K, 0:1]

    x_all = x_ref[...]                              # f32 (C, B*N)

    # ---- tokenizer projection: depth-4 contraction on the VPU --------------
    # featsT_all[d, n] = sum_c wp[d, c] * x[c, n]   -> (D, B*N), one pass for
    # the whole batch (lanes are fully dense: 512 = 4 vregs per sublane row).
    featsT_all = wp[:, 0:1] * x_all[0:1, :]
    for c in range(1, C):
        featsT_all = featsT_all + wp[:, c:c + 1] * x_all[c:c + 1, :]

    def mlp(xT, w1, b1, w2, b2):
        # residual token MLP in (feature, token) layout; bf16 MXU operands,
        # f32 accumulate + f32 elementwise.
        h = jnp.dot(w1, xT.astype(jnp.bfloat16),
                    preferred_element_type=jnp.float32) + b1
        h = jnp.maximum(h, 0.0)
        return xT + jnp.dot(w2, h.astype(jnp.bfloat16),
                            preferred_element_type=jnp.float32) + b2

    dense_parts = []
    for b in range(B):                              # B=2, unrolled at trace time
        # 256-lane slice -> tile aligned, free
        featsT = featsT_all[:, b * N:(b + 1) * N]   # f32 (D, N)
        featsT_bf = featsT.astype(jnp.bfloat16)

        # ---- tokenizer: soft-assign over N (lanes), pool --------------------
        logits = jnp.dot(q, featsT_bf,
                         preferred_element_type=jnp.float32) * SCALE      # (T, N)
        m = jnp.max(logits, axis=-1, keepdims=True)
        p = jnp.exp(logits - m)
        attn = p / jnp.sum(p, axis=-1, keepdims=True)                     # (T, N) f32
        attn_bf = attn.astype(jnp.bfloat16)
        attn_nT_bf = attn.T.astype(jnp.bfloat16)    # (N, T): one explicit XLU transpose

        tokT = jnp.dot(featsT_bf, attn_nT_bf,
                       preferred_element_type=jnp.float32)                # (D, T)

        # ---- backbone: two residual MLP stages ------------------------------
        x1T = mlp(tokT, w1a, b1a, w2a, b2a)         # (D, T)
        x2T = mlp(x1T, w1b, b1b, w2b, b2b)          # (D, T)

        # ---- s2d + denseTransform (reassociated) ----------------------------
        # relu((attn^T x1 + attn^T x2) wd + bd) == relu((wd^T (x1T+x2T)) attn + bd)
        zT = jnp.dot(wd, (x1T + x2T).astype(jnp.bfloat16),
                     preferred_element_type=jnp.float32)                  # (D, T)
        denseT = jnp.maximum(
            jnp.dot(zT.astype(jnp.bfloat16), attn_bf,
                    preferred_element_type=jnp.float32) + bd, 0.0)        # (D, N)
        dense_parts.append(denseT.astype(jnp.bfloat16))

    # ---- task head: single (K, B*N) matmul, lane-dense output ---------------
    denseT_all = jnp.concatenate(dense_parts, axis=-1)                    # (D, B*N) bf16
    out_ref[...] = jnp.dot(wc, denseT_all,
                           preferred_element_type=jnp.float32) + bc       # (K, B*N)


# ------------------------------- wrappers ------------------------------------
def forward_feature(params, x_nchw):
    # (B, C, H, W) -> (C, B*N): tiny relayout of the 8 KB input outside the kernel
    x_cbn = jnp.transpose(x_nchw, (1, 0, 2, 3)).reshape(C, BN)
    vmem = pl.BlockSpec(memory_space=pltpu.MemorySpace.VMEM)
    pred = pl.pallas_call(
        _forward_kernel,
        out_shape=jax.ShapeDtypeStruct((K, BN), jnp.float32),
        in_specs=[vmem, vmem, vmem],
        out_specs=vmem,
    )(x_cbn, params["w_slab"], params["f_slab"])
    return pred                                     # (K, B*N), lane-dense


def cross_entropy_loss(pred_kbn, label):
    # taskHead.loss: mean pixel-wise cross entropy, computed directly on the
    # kernel's (K, B, N) layout (reduce over K on sublanes; no NCHW->NHWC relayout).
    logits = pred_kbn.reshape(K, B, N)
    logz = jax.scipy.special.logsumexp(logits, axis=0)                    # (B, N)
    picked = jnp.take_along_axis(logits, label.reshape(1, B, N), axis=0)[0]
    return jnp.mean(logz - picked)


@functools.partial(jax.jit, static_argnames=("is_train",))
def forward(params, x, label, is_train=True):
    pred = forward_feature(params, x)               # (K, B*N)
    if is_train:
        return cross_entropy_loss(pred, label)
    # forward_test: bilinear resize (align_corners=False) -> softmax(dim=1) -> argmax(dim=1)
    pred = jnp.transpose(pred.reshape(K, B, H, W), (1, 0, 2, 3))          # (B, K, H, W)
    pred = jax.image.resize(pred, (B, K) + label.shape[1:], method="bilinear")
    pred = jax.nn.softmax(pred, axis=1)
    return jnp.argmax(pred, axis=1)


# ------------------------------ parameter init --------------------------------
def init_params(key):
    ks = jax.random.split(key, 8)
    s = 0.1
    wpT = s * jax.random.normal(ks[0], (D, C), jnp.float32)
    q = s * jax.random.normal(ks[1], (T, D), jnp.float32)
    w1aT = s * jax.random.normal(ks[2], (HID, D), jnp.float32)
    w2aT = s * jax.random.normal(ks[3], (D, HID), jnp.float32)
    w1bT = s * jax.random.normal(ks[4], (HID, D), jnp.float32)
    w2bT = s * jax.random.normal(ks[5], (D, HID), jnp.float32)
    wdT = s * jax.random.normal(ks[6], (D, D), jnp.float32)
    wcT = s * jax.random.normal(ks[7], (K, D), jnp.float32)
    b1a = jnp.zeros((HID, 1), jnp.float32)
    b2a = jnp.zeros((D, 1), jnp.float32)
    b1b = jnp.zeros((HID, 1), jnp.float32)
    b2b = jnp.zeros((D, 1), jnp.float32)
    bd = jnp.zeros((D, 1), jnp.float32)
    bc = jnp.zeros((K, 1), jnp.float32)

    # ---- pack MXU operands into one bf16 slab (1 DMA) -----------------------
    w = jnp.zeros((W_ROWS, W_COLS), jnp.float32)
    w = w.at[Q_R:Q_R + T, 0:D].set(q)
    w = w.at[W1A_R:W1A_R + HID, 0:D].set(w1aT)
    w = w.at[W2A_R:W2A_R + D, 0:HID].set(w2aT)
    w = w.at[W1B_R:W1B_R + HID, 0:D].set(w1bT)
    w = w.at[W2B_R:W2B_R + D, 0:HID].set(w2bT)
    w = w.at[WD_R:WD_R + D, 0:D].set(wdT)
    w = w.at[WC_R:WC_R + K, 0:D].set(wcT)
    w_slab = w.astype(jnp.bfloat16)

    # ---- pack VPU-side params (input projection + biases) into one f32 slab -
    f = jnp.zeros((F_ROWS, F_COLS), jnp.float32)
    f = f.at[WP_R:WP_R + D, 0:C].set(wpT)
    f = f.at[B1A_R:B1A_R + HID, 0:1].set(b1a)
    f = f.at[B2A_R:B2A_R + D, 0:1].set(b2a)
    f = f.at[B1B_R:B1B_R + HID, 0:1].set(b1b)
    f = f.at[B2B_R:B2B_R + D, 0:1].set(b2b)
    f = f.at[BD_R:BD_R + D, 0:1].set(bd)
    f = f.at[BC_R:BC_R + K, 0:1].set(bc)

    return {"w_slab": w_slab, "f_slab": f}


if __name__ == "__main__":
    key = jax.random.PRNGKey(0)
    kx, kl, kp = jax.random.split(key, 3)
    x = jax.random.normal(kx, (B, C, H, W), jnp.float32)
    label = jax.random.randint(kl, (B, H, W), 0, K, jnp.int32)
    params = init_params(kp)

    loss = forward(params, x, label, is_train=True)      # forward_train path
    seg = forward(params, x, label, is_train=False)      # forward_test path
    jax.block_until_ready(loss)
    jax.block_until_ready(seg)

    assert loss.shape == () and bool(jnp.isfinite(loss))
    assert seg.shape == (B, H, W)
    print("KERNEL_OK")
</pallas_src>

<mosaic_0001>
module attributes {stable_mosaic.version = 11 : i64} {
  func.func @_forward_kernel(%arg0: memref<4x512xf32, #tpu.memory_space<vmem>>, %arg1: memref<256x128xbf16, #tpu.memory_space<vmem>>, %arg2: memref<264x8xf32, #tpu.memory_space<vmem>>, %arg3: memref<8x512xf32, #tpu.memory_space<vmem>>) attributes {dimension_semantics = [], scalar_prefetch = 0 : i64, scratch_operands = 0 : i64, tpu.core_type = #tpu.core_type<tc>} {
    %c0 = arith.constant 0 : index
    %c0_0 = arith.constant 0 : index
    %0 = vector.load %arg1[%c0, %c0_0] : memref<256x128xbf16, #tpu.memory_space<vmem>>, vector<16x32xbf16>
    %c16 = arith.constant 16 : index
    %c0_1 = arith.constant 0 : index
    %1 = vector.load %arg1[%c16, %c0_1] : memref<256x128xbf16, #tpu.memory_space<vmem>>, vector<64x32xbf16>
    %c80 = arith.constant 80 : index
    %c0_2 = arith.constant 0 : index
    %2 = vector.load %arg1[%c80, %c0_2] : memref<256x128xbf16, #tpu.memory_space<vmem>>, vector<32x64xbf16>
    %c112 = arith.constant 112 : index
    %c0_3 = arith.constant 0 : index
    %3 = vector.load %arg1[%c112, %c0_3] : memref<256x128xbf16, #tpu.memory_space<vmem>>, vector<64x32xbf16>
    %c176 = arith.constant 176 : index
    %c0_4 = arith.constant 0 : index
    %4 = vector.load %arg1[%c176, %c0_4] : memref<256x128xbf16, #tpu.memory_space<vmem>>, vector<32x64xbf16>
    %c208 = arith.constant 208 : index
    %c0_5 = arith.constant 0 : index
    %5 = vector.load %arg1[%c208, %c0_5] : memref<256x128xbf16, #tpu.memory_space<vmem>>, vector<32x32xbf16>
    %c240 = arith.constant 240 : index
    %c0_6 = arith.constant 0 : index
    %6 = vector.load %arg1[%c240, %c0_6] : memref<256x128xbf16, #tpu.memory_space<vmem>>, vector<8x32xbf16>
    %c0_7 = arith.constant 0 : index
    %c0_8 = arith.constant 0 : index
    %7 = vector.load %arg2[%c0_7, %c0_8] : memref<264x8xf32, #tpu.memory_space<vmem>>, vector<32x4xf32>
    %c32 = arith.constant 32 : index
    %c0_9 = arith.constant 0 : index
    %8 = vector.load %arg2[%c32, %c0_9] : memref<264x8xf32, #tpu.memory_space<vmem>>, vector<64x1xf32>
    %c96 = arith.constant 96 : index
    %c0_10 = arith.constant 0 : index
    %9 = vector.load %arg2[%c96, %c0_10] : memref<264x8xf32, #tpu.memory_space<vmem>>, vector<32x1xf32>
    %c128 = arith.constant 128 : index
    %c0_11 = arith.constant 0 : index
    %10 = vector.load %arg2[%c128, %c0_11] : memref<264x8xf32, #tpu.memory_space<vmem>>, vector<64x1xf32>
    %c192 = arith.constant 192 : index
    %c0_12 = arith.constant 0 : index
    %11 = vector.load %arg2[%c192, %c0_12] : memref<264x8xf32, #tpu.memory_space<vmem>>, vector<32x1xf32>
    %c224 = arith.constant 224 : index
    %c0_13 = arith.constant 0 : index
    %12 = vector.load %arg2[%c224, %c0_13] : memref<264x8xf32, #tpu.memory_space<vmem>>, vector<32x1xf32>
    %c256 = arith.constant 256 : index
    %c0_14 = arith.constant 0 : index
    %13 = vector.load %arg2[%c256, %c0_14] : memref<264x8xf32, #tpu.memory_space<vmem>>, vector<8x1xf32>
    %c0_15 = arith.constant 0 : index
    %c0_16 = arith.constant 0 : index
    %14 = vector.load %arg0[%c0_15, %c0_16] : memref<4x512xf32, #tpu.memory_space<vmem>>, vector<4x512xf32>
    %15 = vector.extract_strided_slice %7 {offsets = [0, 0], sizes = [32, 1], strides = [1, 1]} : vector<32x4xf32> to vector<32x1xf32>
    %16 = vector.extract_strided_slice %14 {offsets = [0, 0], sizes = [1, 512], strides = [1, 1]} : vector<4x512xf32> to vector<1x512xf32>
    %17 = vector.broadcast %15 : vector<32x1xf32> to vector<32x512xf32>
    %18 = vector.broadcast %16 : vector<1x512xf32> to vector<32x512xf32>
    %19 = arith.mulf %17, %18 : vector<32x512xf32>
    %20 = vector.extract_strided_slice %7 {offsets = [0, 1], sizes = [32, 1], strides = [1, 1]} : vector<32x4xf32> to vector<32x1xf32>
    %21 = vector.extract_strided_slice %14 {offsets = [1, 0], sizes = [1, 512], strides = [1, 1]} : vector<4x512xf32> to vector<1x512xf32>
    %22 = vector.broadcast %20 : vector<32x1xf32> to vector<32x512xf32>
    %23 = vector.broadcast %21 : vector<1x512xf32> to vector<32x512xf32>
    %24 = arith.mulf %22, %23 : vector<32x512xf32>
    %25 = arith.addf %19, %24 : vector<32x512xf32>
    %26 = vector.extract_strided_slice %7 {offsets = [0, 2], sizes = [32, 1], strides = [1, 1]} : vector<32x4xf32> to vector<32x1xf32>
    %27 = vector.extract_strided_slice %14 {offsets = [2, 0], sizes = [1, 512], strides = [1, 1]} : vector<4x512xf32> to vector<1x512xf32>
    %28 = vector.broadcast %26 : vector<32x1xf32> to vector<32x512xf32>
    %29 = vector.broadcast %27 : vector<1x512xf32> to vector<32x512xf32>
    %30 = arith.mulf %28, %29 : vector<32x512xf32>
    %31 = arith.addf %25, %30 : vector<32x512xf32>
    %32 = vector.extract_strided_slice %7 {offsets = [0, 3], sizes = [32, 1], strides = [1, 1]} : vector<32x4xf32> to vector<32x1xf32>
    %33 = vector.extract_strided_slice %14 {offsets = [3, 0], sizes = [1, 512], strides = [1, 1]} : vector<4x512xf32> to vector<1x512xf32>
    %34 = vector.broadcast %32 : vector<32x1xf32> to vector<32x512xf32>
    %35 = vector.broadcast %33 : vector<1x512xf32> to vector<32x512xf32>
    %36 = arith.mulf %34, %35 : vector<32x512xf32>
    %37 = arith.addf %31, %36 : vector<32x512xf32>
    %38 = vector.extract_strided_slice %37 {offsets = [0, 0], sizes = [32, 256], strides = [1, 1]} : vector<32x512xf32> to vector<32x256xf32>
    %39 = arith.truncf %38 : vector<32x256xf32> to vector<32x256xbf16>
    %cst = arith.constant dense<0.000000e+00> : vector<16x256xf32>
    %40 = tpu.matmul %0, %39, %cst {dimension_numbers = #tpu.dot_dimension_numbers<[1], [0], [0], [1], [0, 0, 1, 1], [], []>} : vector<16x32xbf16>, vector<32x256xbf16>, vector<16x256xf32> -> vector<16x256xf32>
    %cst_17 = arith.constant 0.176776692 : f32
    %41 = vector.broadcast %cst_17 : f32 to vector<16x256xf32>
    %42 = arith.mulf %40, %41 : vector<16x256xf32>
    %cst_18 = arith.constant dense<0xFF800000> : vector<16xf32>
    %43 = vector.multi_reduction <maximumf>, %42, %cst_18 [1] : vector<16x256xf32> to vector<16xf32>
    %44 = vector.shape_cast %43 : vector<16xf32> to vector<16x1xf32>
    %45 = vector.broadcast %44 : vector<16x1xf32> to vector<16x256xf32>
    %46 = arith.subf %42, %45 : vector<16x256xf32>
    %47 = math.exp %46 : vector<16x256xf32>
    %cst_19 = arith.constant dense<0.000000e+00> : vector<16xf32>
    %48 = vector.multi_reduction <add>, %47, %cst_19 [1] : vector<16x256xf32> to vector<16xf32>
    %49 = vector.shape_cast %48 : vector<16xf32> to vector<16x1xf32>
    %50 = vector.broadcast %49 : vector<16x1xf32> to vector<16x256xf32>
    %51 = arith.divf %47, %50 : vector<16x256xf32>
    %52 = arith.truncf %51 : vector<16x256xf32> to vector<16x256xbf16>
    %53 = tpu.transpose %51, [1, 0] : vector<16x256xf32> -> vector<256x16xf32>
    %54 = arith.truncf %53 : vector<256x16xf32> to vector<256x16xbf16>
    %cst_20 = arith.constant dense<0.000000e+00> : vector<32x16xf32>
    %55 = tpu.matmul %39, %54, %cst_20 {dimension_numbers = #tpu.dot_dimension_numbers<[1], [0], [0], [1], [0, 0, 1, 1], [], []>} : vector<32x256xbf16>, vector<256x16xbf16>, vector<32x16xf32> -> vector<32x16xf32>
    %56 = arith.truncf %55 : vector<32x16xf32> to vector<32x16xbf16>
    %cst_21 = arith.constant dense<0.000000e+00> : vector<64x16xf32>
    %57 = tpu.matmul %1, %56, %cst_21 {dimension_numbers = #tpu.dot_dimension_numbers<[1], [0], [0], [1], [0, 0, 1, 1], [], []>} : vector<64x32xbf16>, vector<32x16xbf16>, vector<64x16xf32> -> vector<64x16xf32>
    %58 = vector.broadcast %8 : vector<64x1xf32> to vector<64x16xf32>
    %59 = arith.addf %57, %58 : vector<64x16xf32>
    %cst_22 = arith.constant 0.000000e+00 : f32
    %60 = vector.broadcast %cst_22 : f32 to vector<64x16xf32>
    %61 = arith.maximumf %59, %60 : vector<64x16xf32>
    %62 = arith.truncf %61 : vector<64x16xf32> to vector<64x16xbf16>
    %cst_23 = arith.constant dense<0.000000e+00> : vector<32x16xf32>
    %63 = tpu.matmul %2, %62, %cst_23 {dimension_numbers = #tpu.dot_dimension_numbers<[1], [0], [0], [1], [0, 0, 1, 1], [], []>} : vector<32x64xbf16>, vector<64x16xbf16>, vector<32x16xf32> -> vector<32x16xf32>
    %64 = arith.addf %55, %63 : vector<32x16xf32>
    %65 = vector.broadcast %9 : vector<32x1xf32> to vector<32x16xf32>
    %66 = arith.addf %64, %65 : vector<32x16xf32>
    %67 = arith.truncf %66 : vector<32x16xf32> to vector<32x16xbf16>
    %cst_24 = arith.constant dense<0.000000e+00> : vector<64x16xf32>
    %68 = tpu.matmul %3, %67, %cst_24 {dimension_numbers = #tpu.dot_dimension_numbers<[1], [0], [0], [1], [0, 0, 1, 1], [], []>} : vector<64x32xbf16>, vector<32x16xbf16>, vector<64x16xf32> -> vector<64x16xf32>
    %69 = vector.broadcast %10 : vector<64x1xf32> to vector<64x16xf32>
    %70 = arith.addf %68, %69 : vector<64x16xf32>
    %cst_25 = arith.constant 0.000000e+00 : f32
    %71 = vector.broadcast %cst_25 : f32 to vector<64x16xf32>
    %72 = arith.maximumf %70, %71 : vector<64x16xf32>
    %73 = arith.truncf %72 : vector<64x16xf32> to vector<64x16xbf16>
    %cst_26 = arith.constant dense<0.000000e+00> : vector<32x16xf32>
    %74 = tpu.matmul %4, %73, %cst_26 {dimension_numbers = #tpu.dot_dimension_numbers<[1], [0], [0], [1], [0, 0, 1, 1], [], []>} : vector<32x64xbf16>, vector<64x16xbf16>, vector<32x16xf32> -> vector<32x16xf32>
    %75 = arith.addf %66, %74 : vector<32x16xf32>
    %76 = vector.broadcast %11 : vector<32x1xf32> to vector<32x16xf32>
    %77 = arith.addf %75, %76 : vector<32x16xf32>
    %78 = arith.addf %66, %77 : vector<32x16xf32>
    %79 = arith.truncf %78 : vector<32x16xf32> to vector<32x16xbf16>
    %cst_27 = arith.constant dense<0.000000e+00> : vector<32x16xf32>
    %80 = tpu.matmul %5, %79, %cst_27 {dimension_numbers = #tpu.dot_dimension_numbers<[1], [0], [0], [1], [0, 0, 1, 1], [], []>} : vector<32x32xbf16>, vector<32x16xbf16>, vector<32x16xf32> -> vector<32x16xf32>
    %81 = arith.truncf %80 : vector<32x16xf32> to vector<32x16xbf16>
    %cst_28 = arith.constant dense<0.000000e+00> : vector<32x256xf32>
    %82 = tpu.matmul %81, %52, %cst_28 {dimension_numbers = #tpu.dot_dimension_numbers<[1], [0], [0], [1], [0, 0, 1, 1], [], []>} : vector<32x16xbf16>, vector<16x256xbf16>, vector<32x256xf32> -> vector<32x256xf32>
    %83 = vector.broadcast %12 : vector<32x1xf32> to vector<32x256xf32>
    %84 = arith.addf %82, %83 : vector<32x256xf32>
    %cst_29 = arith.constant 0.000000e+00 : f32
    %85 = vector.broadcast %cst_29 : f32 to vector<32x256xf32>
    %86 = arith.maximumf %84, %85 : vector<32x256xf32>
    %87 = arith.truncf %86 : vector<32x256xf32> to vector<32x256xbf16>
    %88 = vector.extract_strided_slice %37 {offsets = [0, 256], sizes = [32, 256], strides = [1, 1]} : vector<32x512xf32> to vector<32x256xf32>
    %89 = arith.truncf %88 : vector<32x256xf32> to vector<32x256xbf16>
    %cst_30 = arith.constant dense<0.000000e+00> : vector<16x256xf32>
    %90 = tpu.matmul %0, %89, %cst_30 {dimension_numbers = #tpu.dot_dimension_numbers<[1], [0], [0], [1], [0, 0, 1, 1], [], []>} : vector<16x32xbf16>, vector<32x256xbf16>, vector<16x256xf32> -> vector<16x256xf32>
    %cst_31 = arith.constant 0.176776692 : f32
    %91 = vector.broadcast %cst_31 : f32 to vector<16x256xf32>
    %92 = arith.mulf %90, %91 : vector<16x256xf32>
    %cst_32 = arith.constant dense<0xFF800000> : vector<16xf32>
    %93 = vector.multi_reduction <maximumf>, %92, %cst_32 [1] : vector<16x256xf32> to vector<16xf32>
    %94 = vector.shape_cast %93 : vector<16xf32> to vector<16x1xf32>
    %95 = vector.broadcast %94 : vector<16x1xf32> to vector<16x256xf32>
    %96 = arith.subf %92, %95 : vector<16x256xf32>
    %97 = math.exp %96 : vector<16x256xf32>
    %cst_33 = arith.constant dense<0.000000e+00> : vector<16xf32>
    %98 = vector.multi_reduction <add>, %97, %cst_33 [1] : vector<16x256xf32> to vector<16xf32>
    %99 = vector.shape_cast %98 : vector<16xf32> to vector<16x1xf32>
    %100 = vector.broadcast %99 : vector<16x1xf32> to vector<16x256xf32>
    %101 = arith.divf %97, %100 : vector<16x256xf32>
    %102 = arith.truncf %101 : vector<16x256xf32> to vector<16x256xbf16>
    %103 = tpu.transpose %101, [1, 0] : vector<16x256xf32> -> vector<256x16xf32>
    %104 = arith.truncf %103 : vector<256x16xf32> to vector<256x16xbf16>
    %cst_34 = arith.constant dense<0.000000e+00> : vector<32x16xf32>
    %105 = tpu.matmul %89, %104, %cst_34 {dimension_numbers = #tpu.dot_dimension_numbers<[1], [0], [0], [1], [0, 0, 1, 1], [], []>} : vector<32x256xbf16>, vector<256x16xbf16>, vector<32x16xf32> -> vector<32x16xf32>
    %106 = arith.truncf %105 : vector<32x16xf32> to vector<32x16xbf16>
    %cst_35 = arith.constant dense<0.000000e+00> : vector<64x16xf32>
    %107 = tpu.matmul %1, %106, %cst_35 {dimension_numbers = #tpu.dot_dimension_numbers<[1], [0], [0], [1], [0, 0, 1, 1], [], []>} : vector<64x32xbf16>, vector<32x16xbf16>, vector<64x16xf32> -> vector<64x16xf32>
    %108 = vector.broadcast %8 : vector<64x1xf32> to vector<64x16xf32>
    %109 = arith.addf %107, %108 : vector<64x16xf32>
    %cst_36 = arith.constant 0.000000e+00 : f32
    %110 = vector.broadcast %cst_36 : f32 to vector<64x16xf32>
    %111 = arith.maximumf %109, %110 : vector<64x16xf32>
    %112 = arith.truncf %111 : vector<64x16xf32> to vector<64x16xbf16>
    %cst_37 = arith.constant dense<0.000000e+00> : vector<32x16xf32>
    %113 = tpu.matmul %2, %112, %cst_37 {dimension_numbers = #tpu.dot_dimension_numbers<[1], [0], [0], [1], [0, 0, 1, 1], [], []>} : vector<32x64xbf16>, vector<64x16xbf16>, vector<32x16xf32> -> vector<32x16xf32>
    %114 = arith.addf %105, %113 : vector<32x16xf32>
    %115 = vector.broadcast %9 : vector<32x1xf32> to vector<32x16xf32>
    %116 = arith.addf %114, %115 : vector<32x16xf32>
    %117 = arith.truncf %116 : vector<32x16xf32> to vector<32x16xbf16>
    %cst_38 = arith.constant dense<0.000000e+00> : vector<64x16xf32>
    %118 = tpu.matmul %3, %117, %cst_38 {dimension_numbers = #tpu.dot_dimension_numbers<[1], [0], [0], [1], [0, 0, 1, 1], [], []>} : vector<64x32xbf16>, vector<32x16xbf16>, vector<64x16xf32> -> vector<64x16xf32>
    %119 = vector.broadcast %10 : vector<64x1xf32> to vector<64x16xf32>
    %120 = arith.addf %118, %119 : vector<64x16xf32>
    %cst_39 = arith.constant 0.000000e+00 : f32
    %121 = vector.broadcast %cst_39 : f32 to vector<64x16xf32>
    %122 = arith.maximumf %120, %121 : vector<64x16xf32>
    %123 = arith.truncf %122 : vector<64x16xf32> to vector<64x16xbf16>
    %cst_40 = arith.constant dense<0.000000e+00> : vector<32x16xf32>
    %124 = tpu.matmul %4, %123, %cst_40 {dimension_numbers = #tpu.dot_dimension_numbers<[1], [0], [0], [1], [0, 0, 1, 1], [], []>} : vector<32x64xbf16>, vector<64x16xbf16>, vector<32x16xf32> -> vector<32x16xf32>
    %125 = arith.addf %116, %124 : vector<32x16xf32>
    %126 = vector.broadcast %11 : vector<32x1xf32> to vector<32x16xf32>
    %127 = arith.addf %125, %126 : vector<32x16xf32>
    %128 = arith.addf %116, %127 : vector<32x16xf32>
    %129 = arith.truncf %128 : vector<32x16xf32> to vector<32x16xbf16>
    %cst_41 = arith.constant dense<0.000000e+00> : vector<32x16xf32>
    %130 = tpu.matmul %5, %129, %cst_41 {dimension_numbers = #tpu.dot_dimension_numbers<[1], [0], [0], [1], [0, 0, 1, 1], [], []>} : vector<32x32xbf16>, vector<32x16xbf16>, vector<32x16xf32> -> vector<32x16xf32>
    %131 = arith.truncf %130 : vector<32x16xf32> to vector<32x16xbf16>
    %cst_42 = arith.constant dense<0.000000e+00> : vector<32x256xf32>
    %132 = tpu.matmul %131, %102, %cst_42 {dimension_numbers = #tpu.dot_dimension_numbers<[1], [0], [0], [1], [0, 0, 1, 1], [], []>} : vector<32x16xbf16>, vector<16x256xbf16>, vector<32x256xf32> -> vector<32x256xf32>
    %133 = vector.broadcast %12 : vector<32x1xf32> to vector<32x256xf32>
    %134 = arith.addf %132, %133 : vector<32x256xf32>
    %cst_43 = arith.constant 0.000000e+00 : f32
    %135 = vector.broadcast %cst_43 : f32 to vector<32x256xf32>
    %136 = arith.maximumf %134, %135 : vector<32x256xf32>
    %137 = arith.truncf %136 : vector<32x256xf32> to vector<32x256xbf16>
    %138 = tpu.concatenate %87, %137 in 1 : vector<32x256xbf16>, vector<32x256xbf16> -> vector<32x512xbf16>
    %cst_44 = arith.constant dense<0.000000e+00> : vector<8x512xf32>
    %139 = tpu.matmul %6, %138, %cst_44 {dimension_numbers = #tpu.dot_dimension_numbers<[1], [0], [0], [1], [0, 0, 1, 1], [], []>} : vector<8x32xbf16>, vector<32x512xbf16>, vector<8x512xf32> -> vector<8x512xf32>
    %140 = vector.broadcast %13 : vector<8x1xf32> to vector<8x512xf32>
    %141 = arith.addf %139, %140 : vector<8x512xf32>
    %c0_45 = arith.constant 0 : index
    %c0_46 = arith.constant 0 : index
    %142 = vector.load %arg3[%c0_45, %c0_46] : memref<8x512xf32, #tpu.memory_space<vmem>>, vector<8x512xf32>
    tpu.vector_store %arg3[%c0_45, %c0_46], %141 {strides = array<i32>} : memref<8x512xf32, #tpu.memory_space<vmem>>, vector<8x512xf32>,
    return
  }
}

</mosaic_0001>

<llo_original>
// kernel: forward.1
$region0: #{forward.1}
  #allocation0 [shape = 'u32[]', space=smem, size = 0x4, offset = 0x4, fixed_abs, tag = 'smem constant byte address 0x4 - core index']
  #allocation1 [shape = 'u32[72,128]{1,0:T(1,128)}', space=vmem, size = 0x9000, scoped, tag = 'internal scratch']
  %s0 = inlined_call_operand.vmem [shape: f32[4,512], index: 0, kind: input, shape index: {}]
  %s1 = inlined_call_operand.vmem [shape: bf16[256,128], index: 1, kind: input, shape index: {}]
  %s2 = inlined_call_operand.vmem [shape: f32[264,8], index: 2, kind: input, shape index: {}]
  %s3 = inlined_call_operand.vmem [shape: f32[8,512], index: 3, kind: output, shape index: {}]
  %s4 = sld [smem:[#allocation0]]
  $region22: #{forward.1} parent=0
    _
  %s6 = ssub.s32 1, %s4
  %s7 = scalar_select 0, %s6, %s4
  // Predicated region
  $region2: #{forward.1} parent=0 // pred_check
    _
  $region3: #{forward.1} parent=0 // pred_check_branch
    %9 = sbr.rel (0) target = $region5
  $region4: #{forward.1} parent=0 // pred_region
    _
  $region5: #{forward.1} parent=0 // pred_fallthru
    _
  // Predicated region
  $region6: #{forward.1} parent=0 // pred_check
    _
  $region7: #{forward.1} parent=0 // pred_check_branch
    %11 = sbr.rel (0) target = $region9
  $region8: #{forward.1} parent=0 // pred_region
    _
  $region9: #{forward.1} parent=0 // pred_fallthru
    _
  // Predicated region
  $region10: #{forward.1} parent=0 // pred_check
    _
  $region11: #{forward.1} parent=0 // pred_check_branch
    %13 = sbr.rel (0) target = $region13
  $region12: #{forward.1} parent=0 // pred_region
    _
  $region13: #{forward.1} parent=0 // pred_fallthru
    _
  %v15 = vld [vmem:[%s1] sm:$0xf]
  %v16 = vld [vmem:[%s1 + $0x4] sm:$0xf]
  %v17 = vld [vmem:[%s1 + $0x8] sm:$0xf]
  %v18 = vld [vmem:[%s1 + $0xc] sm:$0xf]
  %v19 = vld [vmem:[%s1 + $0x10] sm:$0xf]
  %v20 = vld [vmem:[%s1 + $0x14] sm:$0xf]
  %v21 = vld [vmem:[%s1 + $0x18] sm:$0xf]
  %v22 = vld [vmem:[%s1 + $0x1c] sm:$0xf]
  %v23 = vld [vmem:[%s1 + $0x20] sm:$0xf]
  %v24 = vld [vmem:[%s1 + $0x24] sm:$0xf]
  %v25 = vld [vmem:[%s1 + $0x28] sm:$0xf]
  %v26 = vld [vmem:[%s1 + $0x2c] sm:$0xf]
  %v27 = vld [vmem:[%s1 + $0x30] sm:$0xf]
  %v28 = vld [vmem:[%s1 + $0x34] sm:$0xf]
  %v29 = vld [vmem:[%s1 + $0x38] sm:$0xf]
  %v30 = vld [vmem:[%s1 + $0x3c] sm:$0xf]
  %v31 = vld [vmem:[%s1 + $0x40] sm:$0xf]
  %v32 = vld [vmem:[%s1 + $0x44] sm:$0xf]
  %v33 = vld [vmem:[%s1 + $0x48] sm:$0xf]
  %v34 = vld [vmem:[%s1 + $0x4c] sm:$0xf]
  %v35 = vld [vmem:[%s1 + $0x50] sm:$0xf]
  %v36 = vld [vmem:[%s1 + $0x54] sm:$0xf]
  %v37 = vld [vmem:[%s1 + $0x58] sm:$0xf]
  %v38 = vld [vmem:[%s1 + $0x5c] sm:$0xf]
  %v39 = vld [vmem:[%s1 + $0x60] sm:$0xf]
  %v40 = vld [vmem:[%s1 + $0x64] sm:$0xf]
  %v41 = vld [vmem:[%s1 + $0x68] sm:$0xf]
  %v42 = vld [vmem:[%s1 + $0x6c] sm:$0xf]
  %v43 = vld [vmem:[%s1 + $0x70] sm:$0xf]
  %v44 = vld [vmem:[%s1 + $0x74] sm:$0xf]
  %v45 = vld [vmem:[%s1 + $0x78] sm:$0xf]
  %v46 = vld [vmem:[%s2] sm:$0xff]
  %v47 = vld [vmem:[%s2 + $0x8] sm:$0xff]
  %v48 = vld [vmem:[%s2 + $0x10] sm:$0xff]
  %v49 = vld [vmem:[%s2 + $0x18] sm:$0xff]
  %v50 = vld [vmem:[%s2 + $0x20] sm:$0xff]
  %v51 = vld [vmem:[%s2 + $0x28] sm:$0xff]
  %v52 = vld [vmem:[%s2 + $0x30] sm:$0xff]
  %v53 = vld [vmem:[%s2 + $0x38] sm:$0xff]
  %v54 = vld [vmem:[%s2 + $0x40] sm:$0xff]
  %v55 = vld [vmem:[%s2 + $0x48] sm:$0xff]
  %v56 = vld [vmem:[%s2 + $0x50] sm:$0xff]
  %v57 = vld [vmem:[%s2 + $0x58] sm:$0xff]
  %v58 = vld [vmem:[%s2 + $0x60] sm:$0xff]
  %v59 = vld [vmem:[%s2 + $0x68] sm:$0xff]
  %v60 = vld [vmem:[%s2 + $0x70] sm:$0xff]
  %v61 = vld [vmem:[%s2 + $0x78] sm:$0xff]
  %v62 = vld [vmem:[%s2 + $0x80] sm:$0xff]
  %v63 = vld [vmem:[%s2 + $0x88] sm:$0xff]
  %v64 = vld [vmem:[%s2 + $0x90] sm:$0xff]
  %v65 = vld [vmem:[%s2 + $0x98] sm:$0xff]
  %v66 = vld [vmem:[%s2 + $0xa0] sm:$0xff]
  %v67 = vld [vmem:[%s2 + $0xa8] sm:$0xff]
  %v68 = vld [vmem:[%s2 + $0xb0] sm:$0xff]
  %v69 = vld [vmem:[%s2 + $0xb8] sm:$0xff]
  %v70 = vld [vmem:[%s2 + $0xc0] sm:$0xff]
  %v71 = vld [vmem:[%s2 + $0xc8] sm:$0xff]
  %v72 = vld [vmem:[%s2 + $0xd0] sm:$0xff]
  %v73 = vld [vmem:[%s2 + $0xd8] sm:$0xff]
  %v74 = vld [vmem:[%s2 + $0xe0] sm:$0xff]
  %v75 = vld [vmem:[%s2 + $0xe8] sm:$0xff]
  %v76 = vld [vmem:[%s2 + $0xf0] sm:$0xff]
  %v77 = vld [vmem:[%s2 + $0xf8] sm:$0xff]
  %v78 = vld [vmem:[%s2 + $0x100] sm:$0xff]
  %v79 = vld [vmem:[%s0] sm:$0xff]
  %v80 = vld [vmem:[%s0 + $0x8] sm:$0xff]
  %82 = vset.pattern.permute.xlu0 0
  %83 = vperm.xlu0 %82, %v46
  %v84 = vpop.permute.xlu0 %83
  %87 = vset.pattern.permute.xlu0 0
  %88 = vperm.xlu0 %87, %v47
  %v89 = vpop.permute.xlu0 %88
  %92 = vset.pattern.permute.xlu0 0
  %93 = vperm.xlu0 %92, %v48
  %v94 = vpop.permute.xlu0 %93
  %97 = vset.pattern.permute.xlu0 0
  %98 = vperm.xlu0 %97, %v49
  %v99 = vpop.permute.xlu0 %98
  %v103 = vperm.slane %v79, 0
  %v104 = vperm.slane %v79, 4
  %v105 = vperm.slane %v80, 0
  %v106 = vperm.slane %v80, 4
  %v111 = vperm.slane %v103, 0
  %v112 = vperm.slane %v104, 0
  %v113 = vperm.slane %v105, 0
  %v114 = vperm.slane %v106, 0
  %v115 = vmul.f32 %v84, %v111
  %v116 = vmul.f32 %v84, %v112
  %v117 = vmul.f32 %v84, %v113
  %v118 = vmul.f32 %v84, %v114
  %v119 = vmul.f32 %v89, %v111
  %v120 = vmul.f32 %v89, %v112
  %v121 = vmul.f32 %v89, %v113
  %v122 = vmul.f32 %v89, %v114
  %v123 = vmul.f32 %v94, %v111
  %v124 = vmul.f32 %v94, %v112
  %v125 = vmul.f32 %v94, %v113
  %v126 = vmul.f32 %v94, %v114
  %v127 = vmul.f32 %v99, %v111
  %v128 = vmul.f32 %v99, %v112
  %v129 = vmul.f32 %v99, %v113
  %v130 = vmul.f32 %v99, %v114
  %131 = vset.pattern.permute.xlu0 1
  %132 = vperm.xlu0 %131, %v46
  %v133 = vpop.permute.xlu0 %132
  %135 = vset.pattern.permute.xlu0 1
  %136 = vperm.xlu0 %135, %v47
  %v137 = vpop.permute.xlu0 %136
  %139 = vset.pattern.permute.xlu0 1
  %140 = vperm.xlu0 %139, %v48
  %v141 = vpop.permute.xlu0 %140
  %143 = vset.pattern.permute.xlu0 1
  %144 = vperm.xlu0 %143, %v49
  %v145 = vpop.permute.xlu0 %144
  %v147 = vperm.slane %v79, 1
  %v148 = vperm.slane %v79, 5
  %v149 = vperm.slane %v80, 1
  %v150 = vperm.slane %v80, 5
  %v155 = vperm.slane %v147, 1
  %v156 = vperm.slane %v148, 1
  %v157 = vperm.slane %v149, 1
  %v158 = vperm.slane %v150, 1
  %v159 = vmul.f32 %v133, %v155
  %v160 = vmul.f32 %v133, %v156
  %v161 = vmul.f32 %v133, %v157
  %v162 = vmul.f32 %v133, %v158
  %v163 = vmul.f32 %v137, %v155
  %v164 = vmul.f32 %v137, %v156
  %v165 = vmul.f32 %v137, %v157
  %v166 = vmul.f32 %v137, %v158
  %v167 = vmul.f32 %v141, %v155
  %v168 = vmul.f32 %v141, %v156
  %v169 = vmul.f32 %v141, %v157
  %v170 = vmul.f32 %v141, %v158
  %v171 = vmul.f32 %v145, %v155
  %v172 = vmul.f32 %v145, %v156
  %v173 = vmul.f32 %v145, %v157
  %v174 = vmul.f32 %v145, %v158
  %v175 = vadd.f32 %v115, %v159
  %v176 = vadd.f32 %v116, %v160
  %v177 = vadd.f32 %v117, %v161
  %v178 = vadd.f32 %v118, %v162
  %v179 = vadd.f32 %v119, %v163
  %v180 = vadd.f32 %v120, %v164
  %v181 = vadd.f32 %v121, %v165
  %v182 = vadd.f32 %v122, %v166
  %v183 = vadd.f32 %v123, %v167
  %v184 = vadd.f32 %v124, %v168
  %v185 = vadd.f32 %v125, %v169
  %v186 = vadd.f32 %v126, %v170
  %v187 = vadd.f32 %v127, %v171
  %v188 = vadd.f32 %v128, %v172
  %v189 = vadd.f32 %v129, %v173
  %v190 = vadd.f32 %v130, %v174
  %191 = vset.pattern.permute.xlu0 2
  %192 = vperm.xlu0 %191, %v46
  %v193 = vpop.permute.xlu0 %192
  %195 = vset.pattern.permute.xlu0 2
  %196 = vperm.xlu0 %195, %v47
  %v197 = vpop.permute.xlu0 %196
  %199 = vset.pattern.permute.xlu0 2
  %200 = vperm.xlu0 %199, %v48
  %v201 = vpop.permute.xlu0 %200
  %203 = vset.pattern.permute.xlu0 2
  %204 = vperm.xlu0 %203, %v49
  %v205 = vpop.permute.xlu0 %204
  %v207 = vperm.slane %v79, 2
  %v208 = vperm.slane %v79, 6
  %v209 = vperm.slane %v80, 2
  %v210 = vperm.slane %v80, 6
  %v215 = vperm.slane %v207, 2
  %v216 = vperm.slane %v208, 2
  %v217 = vperm.slane %v209, 2
  %v218 = vperm.slane %v210, 2
  %v219 = vmul.f32 %v193, %v215
  %v220 = vmul.f32 %v193, %v216
  %v221 = vmul.f32 %v193, %v217
  %v222 = vmul.f32 %v193, %v218
  %v223 = vmul.f32 %v197, %v215
  %v224 = vmul.f32 %v197, %v216
  %v225 = vmul.f32 %v197, %v217
  %v226 = vmul.f32 %v197, %v218
  %v227 = vmul.f32 %v201, %v215
  %v228 = vmul.f32 %v201, %v216
  %v229 = vmul.f32 %v201, %v217
  %v230 = vmul.f32 %v201, %v218
  %v231 = vmul.f32 %v205, %v215
  %v232 = vmul.f32 %v205, %v216
  %v233 = vmul.f32 %v205, %v217
  %v234 = vmul.f32 %v205, %v218
  %v235 = vadd.f32 %v175, %v219
  %v236 = vadd.f32 %v176, %v220
  %v237 = vadd.f32 %v177, %v221
  %v238 = vadd.f32 %v178, %v222
  %v239 = vadd.f32 %v179, %v223
  %v240 = vadd.f32 %v180, %v224
  %v241 = vadd.f32 %v181, %v225
  %v242 = vadd.f32 %v182, %v226
  %v243 = vadd.f32 %v183, %v227
  %v244 = vadd.f32 %v184, %v228
  %v245 = vadd.f32 %v185, %v229
  %v246 = vadd.f32 %v186, %v230
  %v247 = vadd.f32 %v187, %v231
  %v248 = vadd.f32 %v188, %v232
  %v249 = vadd.f32 %v189, %v233
  %v250 = vadd.f32 %v190, %v234
  %251 = vset.pattern.permute.xlu0 3
  %252 = vperm.xlu0 %251, %v46
  %v253 = vpop.permute.xlu0 %252
  %255 = vset.pattern.permute.xlu0 3
  %256 = vperm.xlu0 %255, %v47
  %v257 = vpop.permute.xlu0 %256
  %259 = vset.pattern.permute.xlu0 3
  %260 = vperm.xlu0 %259, %v48
  %v261 = vpop.permute.xlu0 %260
  %263 = vset.pattern.permute.xlu0 3
  %264 = vperm.xlu0 %263, %v49
  %v265 = vpop.permute.xlu0 %264
  %v267 = vperm.slane %v79, 3
  %v268 = vperm.slane %v79, 7
  %v269 = vperm.slane %v80, 3
  %v270 = vperm.slane %v80, 7
  %v275 = vperm.slane %v267, 3
  %v276 = vperm.slane %v268, 3
  %v277 = vperm.slane %v269, 3
  %v278 = vperm.slane %v270, 3
  %v279 = vmul.f32 %v253, %v275
  %v280 = vmul.f32 %v253, %v276
  %v281 = vmul.f32 %v253, %v277
  %v282 = vmul.f32 %v253, %v278
  %v283 = vmul.f32 %v257, %v275
  %v284 = vmul.f32 %v257, %v276
  %v285 = vmul.f32 %v257, %v277
  %v286 = vmul.f32 %v257, %v278
  %v287 = vmul.f32 %v261, %v275
  %v288 = vmul.f32 %v261, %v276
  %v289 = vmul.f32 %v261, %v277
  %v290 = vmul.f32 %v261, %v278
  %v291 = vmul.f32 %v265, %v275
  %v292 = vmul.f32 %v265, %v276
  %v293 = vmul.f32 %v265, %v277
  %v294 = vmul.f32 %v265, %v278
  %v295 = vadd.f32 %v235, %v279
  %v296 = vadd.f32 %v236, %v280
  %v297 = vadd.f32 %v237, %v281
  %v298 = vadd.f32 %v238, %v282
  %v299 = vadd.f32 %v239, %v283
  %v300 = vadd.f32 %v240, %v284
  %v301 = vadd.f32 %v241, %v285
  %v302 = vadd.f32 %v242, %v286
  %v303 = vadd.f32 %v243, %v287
  %v304 = vadd.f32 %v244, %v288
  %v305 = vadd.f32 %v245, %v289
  %v306 = vadd.f32 %v246, %v290
  %v307 = vadd.f32 %v247, %v291
  %v308 = vadd.f32 %v248, %v292
  %v309 = vadd.f32 %v249, %v293
  %v310 = vadd.f32 %v250, %v294
  %v311 = vpack.c.bf16 %v299, %v295
  %v312 = vpack.c.bf16 %v300, %v296
  %v313 = vpack.c.bf16 %v307, %v303
  %v314 = vpack.c.bf16 %v308, %v304
  %v317 = vunpack.c.l.b16 %v15
  %v318 = vunpack.c.l.b16 %v16
  %v319 = vpack.c.b16 %v318, %v317
  %vm320 = vcmask 261120
  %v322 = vsel %vm320, %v319, 0
  %324 = vmatpush.bf16.msra.mxu0 0
  %325 = vmatpush.bf16.msra.mxu0 0
  %326 = vmatpush.bf16.msra.mxu0 0
  %327 = vmatpush.bf16.msra.mxu0 0
  %328 = vmatpush.bf16.msra.mxu0 0
  %329 = vmatpush.bf16.msra.mxu0 0
  %330 = vmatpush.bf16.msra.mxu0 %v313
  %331 = vmatpush.bf16.msra.mxu0 %v311
  %332 = vmatmul.bf16.gmra.mxu0 %v322
  %v333 = vpop.f32.mrf.mxu0
  %v334 = vadd.f32 0.0, %v333
  %v335 = vpop.f32.mrf.mxu0
  %v336 = vadd.f32 0.0, %v335
  %337 = vdwg.mxu0
  %338 = vmatpush.bf16.msra.mxu0 0
  %339 = vmatpush.bf16.msra.mxu0 0
  %340 = vmatpush.bf16.msra.mxu0 0
  %341 = vmatpush.bf16.msra.mxu0 0
  %342 = vmatpush.bf16.msra.mxu0 0
  %343 = vmatpush.bf16.msra.mxu0 0
  %344 = vmatpush.bf16.msra.mxu0 %v314
  %345 = vmatpush.bf16.msra.mxu0 %v312
  %346 = vmatmul.bf16.gmra.mxu0 %v322
  %v347 = vpop.f32.mrf.mxu0
  %v348 = vadd.f32 0.0, %v347
  %v349 = vpop.f32.mrf.mxu0
  %v350 = vadd.f32 0.0, %v349
  %351 = vdwg.mxu0
  %v352 = vmul.f32 %v334, 0.17677669
  %v353 = vmul.f32 %v348, 0.17677669
  %v354 = vmul.f32 %v336, 0.17677669
  %v355 = vmul.f32 %v350, 0.17677669
  %v356 = vmax.f32 %v352, %v353
  %357 = vmax.xlane.f32.xlu0 %v356
  %v358 = vpop.xlane.xlu0 %357
  %v359 = vmax.f32 %v354, %v355
  %360 = vmax.xlane.f32.xlu0 %v359
  %v361 = vpop.xlane.xlu0 %360
  %v362 = vsub.f32 %v352, %v358
  %v363 = vsub.f32 %v353, %v358
  %v364 = vsub.f32 %v354, %v361
  %v365 = vsub.f32 %v355, %v361
  %v366 = vmul.f32 %v362, 1.442695
  %v367 = vpow.pop %v366
  %v368 = vmul.f32 %v363, 1.442695
  %v369 = vpow.pop %v368
  %v370 = vmul.f32 %v364, 1.442695
  %v371 = vpow.pop %v370
  %v372 = vmul.f32 %v365, 1.442695
  %v373 = vpow.pop %v372
  %v374 = vadd.f32 %v367, %v369
  %375 = vadd.xlane.f32.xlu0 %v374
  %v376 = vpop.xlane.xlu0 %375
  %v377 = vadd.f32 %v371, %v373
  %378 = vadd.xlane.f32.xlu0 %v377
  %v379 = vpop.xlane.xlu0 %378
  %v380 = vrcp.pop %v376
  %v381 = vmul.f32 %v376, %v380
  %v382 = vsub.f32 1.0, %v381
  %v383 = vmul.f32 %v380, %v382
  %v384 = vadd.f32 %v380, %v383
  %vm385 = vweird.f32 %v376
  %vm386 = vweird.f32 %v380
  %vm387 = vmor %vm385, %vm386
  %v388 = vsel %vm387, %v380, %v384
  %v389 = vand.u32 2147483647, %v376
  %vm390 = vcmp.eq.f32.partialorder %v389, 8.507059e+37
  %v391 = vand.u32 %v376, 2147483648
  %v392 = vor.u32 1.1754944e-38, %v391
  %v393 = vsel %vm390, %v392, %v388
  %v394 = vmul.f32 %v367, %v393
  %v395 = vmul.f32 %v369, %v393
  %v396 = vrcp.pop %v379
  %v397 = vmul.f32 %v379, %v396
  %v398 = vsub.f32 1.0, %v397
  %v399 = vmul.f32 %v396, %v398
  %v400 = vadd.f32 %v396, %v399
  %vm401 = vweird.f32 %v379
  %vm402 = vweird.f32 %v396
  %vm403 = vmor %vm401, %vm402
  %v404 = vsel %vm403, %v396, %v400
  %v405 = vand.u32 2147483647, %v379
  %vm406 = vcmp.eq.f32.partialorder %v405, 8.507059e+37
  %v407 = vand.u32 %v379, 2147483648
  %v408 = vor.u32 1.1754944e-38, %v407
  %v409 = vsel %vm406, %v408, %v404
  %v410 = vmul.f32 %v371, %v409
  %v411 = vmul.f32 %v373, %v409
  %v412 = vpack.c.bf16 %v410, %v394
  %v413 = vpack.c.bf16 %v411, %v395
  %414 = vxpose.xlu0.b32.start [1/16] %v394, 128
  %415 = vxpose.xlu0.b32.cont [2/16] %v410, 128
  %416 = vxpose.xlu0.b32.cont [3/16] 0.0, 128
  %417 = vxpose.xlu0.b32.cont [4/16] 0.0, 128
  %418 = vxpose.xlu0.b32.cont [5/16] 0.0, 128
  %419 = vxpose.xlu0.b32.cont [6/16] 0.0, 128
  %420 = vxpose.xlu0.b32.cont [7/16] 0.0, 128
  %421 = vxpose.xlu0.b32.cont [8/16] 0.0, 128
  %422 = vxpose.xlu0.b32.cont [9/16] 0.0, 128
  %423 = vxpose.xlu0.b32.cont [10/16] 0.0, 128
  %424 = vxpose.xlu0.b32.cont [11/16] 0.0, 128
  %425 = vxpose.xlu0.b32.cont [12/16] 0.0, 128
  %426 = vxpose.xlu0.b32.cont [13/16] 0.0, 128
  %427 = vxpose.xlu0.b32.cont [14/16] 0.0, 128
  %428 = vxpose.xlu0.b32.cont [15/16] 0.0, 128
  %429 = vxpose.xlu0.b32.end [16/16] 0.0, 128
  %v430 = vpop.trf.xlu0
  %v431 = vpop.trf.xlu0
  %v432 = vpop.trf.xlu0
  %v433 = vpop.trf.xlu0
  %v434 = vpop.trf.xlu0
  %v435 = vpop.trf.xlu0
  %v436 = vpop.trf.xlu0
  %v437 = vpop.trf.xlu0
  %v438 = vpop.trf.xlu0
  %v439 = vpop.trf.xlu0
  %v440 = vpop.trf.xlu0
  %v441 = vpop.trf.xlu0
  %v442 = vpop.trf.xlu0
  %v443 = vpop.trf.xlu0
  %v444 = vpop.trf.xlu0
  %v445 = vpop.trf.xlu0
  %446 = vxpose.xlu0.b32.start [1/16] %v395, 128
  %447 = vxpose.xlu0.b32.cont [2/16] %v411, 128
  %448 = vxpose.xlu0.b32.cont [3/16] 0.0, 128
  %449 = vxpose.xlu0.b32.cont [4/16] 0.0, 128
  %450 = vxpose.xlu0.b32.cont [5/16] 0.0, 128
  %451 = vxpose.xlu0.b32.cont [6/16] 0.0, 128
  %452 = vxpose.xlu0.b32.cont [7/16] 0.0, 128
  %453 = vxpose.xlu0.b32.cont [8/16] 0.0, 128
  %454 = vxpose.xlu0.b32.cont [9/16] 0.0, 128
  %455 = vxpose.xlu0.b32.cont [10/16] 0.0, 128
  %456 = vxpose.xlu0.b32.cont [11/16] 0.0, 128
  %457 = vxpose.xlu0.b32.cont [12/16] 0.0, 128
  %458 = vxpose.xlu0.b32.cont [13/16] 0.0, 128
  %459 = vxpose.xlu0.b32.cont [14/16] 0.0, 128
  %460 = vxpose.xlu0.b32.cont [15/16] 0.0, 128
  %461 = vxpose.xlu0.b32.end [16/16] 0.0, 128
  %v462 = vpop.trf.xlu0
  %v463 = vpop.trf.xlu0
  %v464 = vpop.trf.xlu0
  %v465 = vpop.trf.xlu0
  %v466 = vpop.trf.xlu0
  %v467 = vpop.trf.xlu0
  %v468 = vpop.trf.xlu0
  %v469 = vpop.trf.xlu0
  %v470 = vpop.trf.xlu0
  %v471 = vpop.trf.xlu0
  %v472 = vpop.trf.xlu0
  %v473 = vpop.trf.xlu0
  %v474 = vpop.trf.xlu0
  %v475 = vpop.trf.xlu0
  %v476 = vpop.trf.xlu0
  %v477 = vpop.trf.xlu0
  %v478 = vpack.c.bf16 %v431, %v430
  %v479 = vpack.c.bf16 %v433, %v432
  %v480 = vpack.c.bf16 %v435, %v434
  %v481 = vpack.c.bf16 %v437, %v436
  %v482 = vpack.c.bf16 %v439, %v438
  %v483 = vpack.c.bf16 %v441, %v440
  %v484 = vpack.c.bf16 %v443, %v442
  %v485 = vpack.c.bf16 %v445, %v444
  %v486 = vpack.c.bf16 %v463, %v462
  %v487 = vpack.c.bf16 %v465, %v464
  %v488 = vpack.c.bf16 %v467, %v466
  %v489 = vpack.c.bf16 %v469, %v468
  %v490 = vpack.c.bf16 %v471, %v470
  %v491 = vpack.c.bf16 %v473, %v472
  %v492 = vpack.c.bf16 %v475, %v474
  %v493 = vpack.c.bf16 %v477, %v476
  %494 = vmatpush.bf16.msra.mxu0 %v485
  %495 = vmatpush.bf16.msra.mxu0 %v484
  %496 = vmatpush.bf16.msra.mxu0 %v483
  %497 = vmatpush.bf16.msra.mxu0 %v482
  %498 = vmatpush.bf16.msra.mxu0 %v481
  %499 = vmatpush.bf16.msra.mxu0 %v480
  %500 = vmatpush.bf16.msra.mxu0 %v479
  %501 = vmatpush.bf16.msra.mxu0 %v478
  %502 = vmatmul.bf16.gmra.mxu0 %v311
  %v503 = vpop.f32.mrf.mxu0
  %v504 = vadd.f32 0.0, %v503
  %v505 = vpop.f32.mrf.mxu0
  %v506 = vadd.f32 0.0, %v505
  %507 = vmatmul.bf16.gmra.mxu0 %v313
  %v508 = vpop.f32.mrf.mxu0
  %v509 = vadd.f32 0.0, %v508
  %v510 = vpop.f32.mrf.mxu0
  %v511 = vadd.f32 0.0, %v510
  %512 = vdwg.mxu0
  %513 = vmatpush.bf16.msra.mxu0 %v493
  %514 = vmatpush.bf16.msra.mxu0 %v492
  %515 = vmatpush.bf16.msra.mxu0 %v491
  %516 = vmatpush.bf16.msra.mxu0 %v490
  %517 = vmatpush.bf16.msra.mxu0 %v489
  %518 = vmatpush.bf16.msra.mxu0 %v488
  %519 = vmatpush.bf16.msra.mxu0 %v487
  %520 = vmatpush.bf16.msra.mxu0 %v486
  %521 = vmatmul.bf16.gmra.mxu0 %v312
  %v522 = vpop.f32.mrf.mxu0
  %v523 = vadd.f32 %v504, %v522
  %v524 = vpop.f32.mrf.mxu0
  %v525 = vadd.f32 %v506, %v524
  %526 = vmatmul.bf16.gmra.mxu0 %v314
  %v527 = vpop.f32.mrf.mxu0
  %v528 = vadd.f32 %v509, %v527
  %v529 = vpop.f32.mrf.mxu0
  %v530 = vadd.f32 %v511, %v529
  %531 = vdwg.mxu0
  %v532 = vpack.c.bf16 %v525, %v523
  %v533 = vpack.c.bf16 %v530, %v528
  %535 = vset.pattern.permute.xlu0 0
  %536 = vperm.xlu0 %535, %v50
  %v537 = vpop.permute.xlu0 %536
  %540 = vset.pattern.permute.xlu0 0
  %541 = vperm.xlu0 %540, %v51
  %v542 = vpop.permute.xlu0 %541
  %545 = vset.pattern.permute.xlu0 0
  %546 = vperm.xlu0 %545, %v52
  %v547 = vpop.permute.xlu0 %546
  %550 = vset.pattern.permute.xlu0 0
  %551 = vperm.xlu0 %550, %v53
  %v552 = vpop.permute.xlu0 %551
  %555 = vset.pattern.permute.xlu0 0
  %556 = vperm.xlu0 %555, %v54
  %v557 = vpop.permute.xlu0 %556
  %560 = vset.pattern.permute.xlu0 0
  %561 = vperm.xlu0 %560, %v55
  %v562 = vpop.permute.xlu0 %561
  %565 = vset.pattern.permute.xlu0 0
  %566 = vperm.xlu0 %565, %v56
  %v567 = vpop.permute.xlu0 %566
  %570 = vset.pattern.permute.xlu0 0
  %571 = vperm.xlu0 %570, %v57
  %v572 = vpop.permute.xlu0 %571
  %v582 = vunpack.c.l.b16 %v17
  %v583 = vunpack.c.l.b16 %v18
  %v584 = vunpack.c.l.b16 %v19
  %v585 = vunpack.c.l.b16 %v20
  %v586 = vunpack.c.l.b16 %v21
  %v587 = vunpack.c.l.b16 %v22
  %v588 = vunpack.c.l.b16 %v23
  %v589 = vunpack.c.l.b16 %v24
  %v590 = vpack.c.b16 %v583, %v582
  %v591 = vpack.c.b16 %v585, %v584
  %v592 = vpack.c.b16 %v587, %v586
  %v593 = vpack.c.b16 %v589, %v588
  %v595 = vsel %vm320, %v590, 0
  %v598 = vsel %vm320, %v591, 0
  %v601 = vsel %vm320, %v592, 0
  %v604 = vsel %vm320, %v593, 0
  %606 = vmatpush.bf16.msra.mxu0 0
  %607 = vmatpush.bf16.msra.mxu0 0
  %608 = vmatpush.bf16.msra.mxu0 0
  %609 = vmatpush.bf16.msra.mxu0 0
  %610 = vmatpush.bf16.msra.mxu0 0
  %611 = vmatpush.bf16.msra.mxu0 0
  %612 = vmatpush.bf16.msra.mxu0 %v533
  %613 = vmatpush.bf16.msra.mxu0 %v532
  %614 = vmatmul.bf16.gmra.mxu0 %v595
  %v615 = vpop.f32.mrf.mxu0
  %v616 = vadd.f32 %v537, %v615
  %v617 = vpop.f32.mrf.mxu0
  %v618 = vadd.f32 %v542, %v617
  %619 = vmatmul.bf16.gmra.mxu0 %v598
  %v620 = vpop.f32.mrf.mxu0
  %v621 = vadd.f32 %v547, %v620
  %v622 = vpop.f32.mrf.mxu0
  %v623 = vadd.f32 %v552, %v622
  %624 = vmatmul.bf16.gmra.mxu0 %v601
  %v625 = vpop.f32.mrf.mxu0
  %v626 = vadd.f32 %v557, %v625
  %v627 = vpop.f32.mrf.mxu0
  %v628 = vadd.f32 %v562, %v627
  %629 = vmatmul.bf16.gmra.mxu0 %v604
  %v630 = vpop.f32.mrf.mxu0
  %v631 = vadd.f32 %v567, %v630
  %v632 = vpop.f32.mrf.mxu0
  %v633 = vadd.f32 %v572, %v632
  %634 = vdwg.mxu0
  %v635 = vmax.f32 %v616, 0.0
  %v636 = vmax.f32 %v618, 0.0
  %v637 = vmax.f32 %v621, 0.0
  %v638 = vmax.f32 %v623, 0.0
  %v639 = vmax.f32 %v626, 0.0
  %v640 = vmax.f32 %v628, 0.0
  %v641 = vmax.f32 %v631, 0.0
  %v642 = vmax.f32 %v633, 0.0
  %v643 = vpack.c.bf16 %v636, %v635
  %v644 = vpack.c.bf16 %v638, %v637
  %v645 = vpack.c.bf16 %v640, %v639
  %v646 = vpack.c.bf16 %v642, %v641
  %v651 = vunpack.c.l.b16 %v25
  %v652 = vunpack.c.l.b16 %v26
  %v653 = vunpack.c.l.b16 %v27
  %v654 = vunpack.c.l.b16 %v28
  %v655 = vpack.c.b16 %v652, %v651
  %v656 = vpack.c.b16 %v654, %v653
  %vm657 = vcmask 523264
  %v659 = vsel %vm657, %v655, 0
  %v662 = vsel %vm657, %v656, 0
  %664 = vmatpush.bf16.msra.mxu0 0
  %665 = vmatpush.bf16.msra.mxu0 0
  %666 = vmatpush.bf16.msra.mxu0 0
  %667 = vmatpush.bf16.msra.mxu0 0
  %668 = vmatpush.bf16.msra.mxu0 %v646
  %669 = vmatpush.bf16.msra.mxu0 %v645
  %670 = vmatpush.bf16.msra.mxu0 %v644
  %671 = vmatpush.bf16.msra.mxu0 %v643
  %672 = vmatmul.bf16.gmra.mxu0 %v659
  %v673 = vpop.f32.mrf.mxu0
  %v674 = vadd.f32 0.0, %v673
  %v675 = vpop.f32.mrf.mxu0
  %v676 = vadd.f32 0.0, %v675
  %677 = vmatmul.bf16.gmra.mxu0 %v662
  %v678 = vpop.f32.mrf.mxu0
  %v679 = vadd.f32 0.0, %v678
  %v680 = vpop.f32.mrf.mxu0
  %v681 = vadd.f32 0.0, %v680
  %682 = vdwg.mxu0
  %v683 = vadd.f32 %v523, %v674
  %v684 = vadd.f32 %v525, %v676
  %v685 = vadd.f32 %v528, %v679
  %v686 = vadd.f32 %v530, %v681
  %688 = vset.pattern.permute.xlu0 0
  %689 = vperm.xlu0 %688, %v58
  %v690 = vpop.permute.xlu0 %689
  %693 = vset.pattern.permute.xlu0 0
  %694 = vperm.xlu0 %693, %v59
  %v695 = vpop.permute.xlu0 %694
  %698 = vset.pattern.permute.xlu0 0
  %699 = vperm.xlu0 %698, %v60
  %v700 = vpop.permute.xlu0 %699
  %703 = vset.pattern.permute.xlu0 0
  %704 = vperm.xlu0 %703, %v61
  %v705 = vpop.permute.xlu0 %704
  %v707 = vadd.f32 %v683, %v690
  %v708 = vadd.f32 %v684, %v695
  %v709 = vadd.f32 %v685, %v700
  %v710 = vadd.f32 %v686, %v705
  %v711 = vpack.c.bf16 %v708, %v707
  %v712 = vpack.c.bf16 %v710, %v709
  %714 = vset.pattern.permute.xlu0 0
  %715 = vperm.xlu0 %714, %v62
  %v716 = vpop.permute.xlu0 %715
  %719 = vset.pattern.permute.xlu0 0
  %720 = vperm.xlu0 %719, %v63
  %v721 = vpop.permute.xlu0 %720
  %724 = vset.pattern.permute.xlu0 0
  %725 = vperm.xlu0 %724, %v64
  %v726 = vpop.permute.xlu0 %725
  %729 = vset.pattern.permute.xlu0 0
  %730 = vperm.xlu0 %729, %v65
  %v731 = vpop.permute.xlu0 %730
  %734 = vset.pattern.permute.xlu0 0
  %735 = vperm.xlu0 %734, %v66
  %v736 = vpop.permute.xlu0 %735
  %739 = vset.pattern.permute.xlu0 0
  %740 = vperm.xlu0 %739, %v67
  %v741 = vpop.permute.xlu0 %740
  %744 = vset.pattern.permute.xlu0 0
  %745 = vperm.xlu0 %744, %v68
  %v746 = vpop.permute.xlu0 %745
  %749 = vset.pattern.permute.xlu0 0
  %750 = vperm.xlu0 %749, %v69
  %v751 = vpop.permute.xlu0 %750
  %v761 = vunpack.c.l.b16 %v29
  %v762 = vunpack.c.l.b16 %v30
  %v763 = vunpack.c.l.b16 %v31
  %v764 = vunpack.c.l.b16 %v32
  %v765 = vunpack.c.l.b16 %v33
  %v766 = vunpack.c.l.b16 %v34
  %v767 = vunpack.c.l.b16 %v35
  %v768 = vunpack.c.l.b16 %v36
  %v769 = vpack.c.b16 %v762, %v761
  %v770 = vpack.c.b16 %v764, %v763
  %v771 = vpack.c.b16 %v766, %v765
  %v772 = vpack.c.b16 %v768, %v767
  %v774 = vsel %vm320, %v769, 0
  %v777 = vsel %vm320, %v770, 0
  %v780 = vsel %vm320, %v771, 0
  %v783 = vsel %vm320, %v772, 0
  %785 = vmatpush.bf16.msra.mxu0 0
  %786 = vmatpush.bf16.msra.mxu0 0
  %787 = vmatpush.bf16.msra.mxu0 0
  %788 = vmatpush.bf16.msra.mxu0 0
  %789 = vmatpush.bf16.msra.mxu0 0
  %790 = vmatpush.bf16.msra.mxu0 0
  %791 = vmatpush.bf16.msra.mxu0 %v712
  %792 = vmatpush.bf16.msra.mxu0 %v711
  %793 = vmatmul.bf16.gmra.mxu0 %v774
  %v794 = vpop.f32.mrf.mxu0
  %v795 = vadd.f32 %v716, %v794
  %v796 = vpop.f32.mrf.mxu0
  %v797 = vadd.f32 %v721, %v796
  %798 = vmatmul.bf16.gmra.mxu0 %v777
  %v799 = vpop.f32.mrf.mxu0
  %v800 = vadd.f32 %v726, %v799
  %v801 = vpop.f32.mrf.mxu0
  %v802 = vadd.f32 %v731, %v801
  %803 = vmatmul.bf16.gmra.mxu0 %v780
  %v804 = vpop.f32.mrf.mxu0
  %v805 = vadd.f32 %v736, %v804
  %v806 = vpop.f32.mrf.mxu0
  %v807 = vadd.f32 %v741, %v806
  %808 = vmatmul.bf16.gmra.mxu0 %v783
  %v809 = vpop.f32.mrf.mxu0
  %v810 = vadd.f32 %v746, %v809
  %v811 = vpop.f32.mrf.mxu0
  %v812 = vadd.f32 %v751, %v811
  %813 = vdwg.mxu0
  %v814 = vmax.f32 %v795, 0.0
  %v815 = vmax.f32 %v797, 0.0
  %v816 = vmax.f32 %v800, 0.0
  %v817 = vmax.f32 %v802, 0.0
  %v818 = vmax.f32 %v805, 0.0
  %v819 = vmax.f32 %v807, 0.0
  %v820 = vmax.f32 %v810, 0.0
  %v821 = vmax.f32 %v812, 0.0
  %v822 = vpack.c.bf16 %v815, %v814
  %v823 = vpack.c.bf16 %v817, %v816
  %v824 = vpack.c.bf16 %v819, %v818
  %v825 = vpack.c.bf16 %v821, %v820
  %v830 = vunpack.c.l.b16 %v37
  %v831 = vunpack.c.l.b16 %v38
  %v832 = vunpack.c.l.b16 %v39
  %v833 = vunpack.c.l.b16 %v40
  %v834 = vpack.c.b16 %v831, %v830
  %v835 = vpack.c.b16 %v833, %v832
  %v837 = vsel %vm657, %v834, 0
  %v840 = vsel %vm657, %v835, 0
  %842 = vmatpush.bf16.msra.mxu0 0
  %843 = vmatpush.bf16.msra.mxu0 0
  %844 = vmatpush.bf16.msra.mxu0 0
  %845 = vmatpush.bf16.msra.mxu0 0
  %846 = vmatpush.bf16.msra.mxu0 %v825
  %847 = vmatpush.bf16.msra.mxu0 %v824
  %848 = vmatpush.bf16.msra.mxu0 %v823
  %849 = vmatpush.bf16.msra.mxu0 %v822
  %850 = vmatmul.bf16.gmra.mxu0 %v837
  %v851 = vpop.f32.mrf.mxu0
  %v852 = vadd.f32 0.0, %v851
  %v853 = vpop.f32.mrf.mxu0
  %v854 = vadd.f32 0.0, %v853
  %855 = vmatmul.bf16.gmra.mxu0 %v840
  %v856 = vpop.f32.mrf.mxu0
  %v857 = vadd.f32 0.0, %v856
  %v858 = vpop.f32.mrf.mxu0
  %v859 = vadd.f32 0.0, %v858
  %860 = vdwg.mxu0
  %v861 = vadd.f32 %v707, %v852
  %v862 = vadd.f32 %v708, %v854
  %v863 = vadd.f32 %v709, %v857
  %v864 = vadd.f32 %v710, %v859
  %866 = vset.pattern.permute.xlu0 0
  %867 = vperm.xlu0 %866, %v70
  %v868 = vpop.permute.xlu0 %867
  %871 = vset.pattern.permute.xlu0 0
  %872 = vperm.xlu0 %871, %v71
  %v873 = vpop.permute.xlu0 %872
  %876 = vset.pattern.permute.xlu0 0
  %877 = vperm.xlu0 %876, %v72
  %v878 = vpop.permute.xlu0 %877
  %881 = vset.pattern.permute.xlu0 0
  %882 = vperm.xlu0 %881, %v73
  %v883 = vpop.permute.xlu0 %882
  %v885 = vadd.f32 %v861, %v868
  %v886 = vadd.f32 %v862, %v873
  %v887 = vadd.f32 %v863, %v878
  %v888 = vadd.f32 %v864, %v883
  %v889 = vadd.f32 %v707, %v885
  %v890 = vadd.f32 %v708, %v886
  %v891 = vadd.f32 %v709, %v887
  %v892 = vadd.f32 %v710, %v888
  %v893 = vpack.c.bf16 %v890, %v889
  %v894 = vpack.c.bf16 %v892, %v891
  %v899 = vunpack.c.l.b16 %v41
  %v900 = vunpack.c.l.b16 %v42
  %v901 = vunpack.c.l.b16 %v43
  %v902 = vunpack.c.l.b16 %v44
  %v903 = vpack.c.b16 %v900, %v899
  %v904 = vpack.c.b16 %v902, %v901
  %v906 = vsel %vm320, %v903, 0
  %v909 = vsel %vm320, %v904, 0
  %911 = vmatpush.bf16.msra.mxu0 0
  %912 = vmatpush.bf16.msra.mxu0 0
  %913 = vmatpush.bf16.msra.mxu0 0
  %914 = vmatpush.bf16.msra.mxu0 0
  %915 = vmatpush.bf16.msra.mxu0 0
  %916 = vmatpush.bf16.msra.mxu0 0
  %917 = vmatpush.bf16.msra.mxu0 %v894
  %918 = vmatpush.bf16.msra.mxu0 %v893
  %919 = vmatmul.bf16.gmra.mxu0 %v906
  %v920 = vpop.f32.mrf.mxu0
  %v921 = vadd.f32 0.0, %v920
  %v922 = vpop.f32.mrf.mxu0
  %v923 = vadd.f32 0.0, %v922
  %924 = vmatmul.bf16.gmra.mxu0 %v909
  %v925 = vpop.f32.mrf.mxu0
  %v926 = vadd.f32 0.0, %v925
  %v927 = vpop.f32.mrf.mxu0
  %v928 = vadd.f32 0.0, %v927
  %929 = vdwg.mxu0
  %v930 = vpack.c.bf16 %v923, %v921
  %v931 = vpack.c.bf16 %v928, %v926
  %933 = vset.pattern.permute.xlu0 0
  %934 = vperm.xlu0 %933, %v74
  %v935 = vpop.permute.xlu0 %934
  %938 = vset.pattern.permute.xlu0 0
  %939 = vperm.xlu0 %938, %v75
  %v940 = vpop.permute.xlu0 %939
  %943 = vset.pattern.permute.xlu0 0
  %944 = vperm.xlu0 %943, %v76
  %v945 = vpop.permute.xlu0 %944
  %948 = vset.pattern.permute.xlu0 0
  %949 = vperm.xlu0 %948, %v77
  %v950 = vpop.permute.xlu0 %949
  %vm952 = vcmask 130048
  %v954 = vsel %vm952, %v930, 0
  %v957 = vsel %vm952, %v931, 0
  %959 = vmatpush.bf16.msra.mxu0 0
  %960 = vmatpush.bf16.msra.mxu0 0
  %961 = vmatpush.bf16.msra.mxu0 0
  %962 = vmatpush.bf16.msra.mxu0 0
  %963 = vmatpush.bf16.msra.mxu0 0
  %964 = vmatpush.bf16.msra.mxu0 0
  %965 = vmatpush.bf16.msra.mxu0 0
  %966 = vmatpush.bf16.msra.mxu0 %v412
  %967 = vmatmul.bf16.gmra.mxu0 %v954
  %v968 = vpop.f32.mrf.mxu0
  %v969 = vadd.f32 %v935, %v968
  %v970 = vpop.f32.mrf.mxu0
  %v971 = vadd.f32 %v940, %v970
  %972 = vmatmul.bf16.gmra.mxu0 %v957
  %v973 = vpop.f32.mrf.mxu0
  %v974 = vadd.f32 %v945, %v973
  %v975 = vpop.f32.mrf.mxu0
  %v976 = vadd.f32 %v950, %v975
  %977 = vdwg.mxu0
  %978 = vmatpush.bf16.msra.mxu0 0
  %979 = vmatpush.bf16.msra.mxu0 0
  %980 = vmatpush.bf16.msra.mxu0 0
  %981 = vmatpush.bf16.msra.mxu0 0
  %982 = vmatpush.bf16.msra.mxu0 0
  %983 = vmatpush.bf16.msra.mxu0 0
  %984 = vmatpush.bf16.msra.mxu0 0
  %985 = vmatpush.bf16.msra.mxu0 %v413
  %986 = vmatmul.bf16.gmra.mxu0 %v954
  %v987 = vpop.f32.mrf.mxu0
  %v988 = vadd.f32 %v935, %v987
  %v989 = vpop.f32.mrf.mxu0
  %v990 = vadd.f32 %v940, %v989
  %991 = vmatmul.bf16.gmra.mxu0 %v957
  %v992 = vpop.f32.mrf.mxu0
  %v993 = vadd.f32 %v945, %v992
  %v994 = vpop.f32.mrf.mxu0
  %v995 = vadd.f32 %v950, %v994
  %996 = vdwg.mxu0
  %v997 = vmax.f32 %v969, 0.0
  %v998 = vmax.f32 %v988, 0.0
  %v999 = vmax.f32 %v971, 0.0
  %v1000 = vmax.f32 %v990, 0.0
  %v1001 = vmax.f32 %v974, 0.0
  %v1002 = vmax.f32 %v993, 0.0
  %v1003 = vmax.f32 %v976, 0.0
  %v1004 = vmax.f32 %v995, 0.0
  %v1005 = vpack.c.bf16 %v998, %v997
  %v1006 = vpack.c.bf16 %v1000, %v999
  %v1007 = vpack.c.bf16 %v1002, %v1001
  %v1008 = vpack.c.bf16 %v1004, %v1003
  %v1009 = vpack.c.bf16 %v301, %v297
  %v1010 = vpack.c.bf16 %v302, %v298
  %v1011 = vpack.c.bf16 %v309, %v305
  %v1012 = vpack.c.bf16 %v310, %v306
  %1013 = vmatpush.bf16.msra.mxu0 0
  %1014 = vmatpush.bf16.msra.mxu0 0
  %1015 = vmatpush.bf16.msra.mxu0 0
  %1016 = vmatpush.bf16.msra.mxu0 0
  %1017 = vmatpush.bf16.msra.mxu0 0
  %1018 = vmatpush.bf16.msra.mxu0 0
  %1019 = vmatpush.bf16.msra.mxu0 %v1011
  %1020 = vmatpush.bf16.msra.mxu0 %v1009
  %1021 = vmatmul.bf16.gmra.mxu0 %v322
  %v1022 = vpop.f32.mrf.mxu0
  %v1023 = vadd.f32 0.0, %v1022
  %v1024 = vpop.f32.mrf.mxu0
  %v1025 = vadd.f32 0.0, %v1024
  %1026 = vdwg.mxu0
  %1027 = vmatpush.bf16.msra.mxu0 0
  %1028 = vmatpush.bf16.msra.mxu0 0
  %1029 = vmatpush.bf16.msra.mxu0 0
  %1030 = vmatpush.bf16.msra.mxu0 0
  %1031 = vmatpush.bf16.msra.mxu0 0
  %1032 = vmatpush.bf16.msra.mxu0 0
  %1033 = vmatpush.bf16.msra.mxu0 %v1012
  %1034 = vmatpush.bf16.msra.mxu0 %v1010
  %1035 = vmatmul.bf16.gmra.mxu0 %v322
  %v1036 = vpop.f32.mrf.mxu0
  %v1037 = vadd.f32 0.0, %v1036
  %v1038 = vpop.f32.mrf.mxu0
  %v1039 = vadd.f32 0.0, %v1038
  %1040 = vdwg.mxu0
  %v1041 = vmul.f32 %v1023, 0.17677669
  %v1042 = vmul.f32 %v1037, 0.17677669
  %v1043 = vmul.f32 %v1025, 0.17677669
  %v1044 = vmul.f32 %v1039, 0.17677669
  %v1045 = vmax.f32 %v1041, %v1042
  %1046 = vmax.xlane.f32.xlu0 %v1045
  %v1047 = vpop.xlane.xlu0 %1046
  %v1048 = vmax.f32 %v1043, %v1044
  %1049 = vmax.xlane.f32.xlu0 %v1048
  %v1050 = vpop.xlane.xlu0 %1049
  %v1051 = vsub.f32 %v1041, %v1047
  %v1052 = vsub.f32 %v1042, %v1047
  %v1053 = vsub.f32 %v1043, %v1050
  %v1054 = vsub.f32 %v1044, %v1050
  %v1055 = vmul.f32 %v1051, 1.442695
  %v1056 = vpow.pop %v1055
  %v1057 = vmul.f32 %v1052, 1.442695
  %v1058 = vpow.pop %v1057
  %v1059 = vmul.f32 %v1053, 1.442695
  %v1060 = vpow.pop %v1059
  %v1061 = vmul.f32 %v1054, 1.442695
  %v1062 = vpow.pop %v1061
  %v1063 = vadd.f32 %v1056, %v1058
  %1064 = vadd.xlane.f32.xlu0 %v1063
  %v1065 = vpop.xlane.xlu0 %1064
  %v1066 = vadd.f32 %v1060, %v1062
  %1067 = vadd.xlane.f32.xlu0 %v1066
  %v1068 = vpop.xlane.xlu0 %1067
  %v1069 = vrcp.pop %v1065
  %v1070 = vmul.f32 %v1065, %v1069
  %v1071 = vsub.f32 1.0, %v1070
  %v1072 = vmul.f32 %v1069, %v1071
  %v1073 = vadd.f32 %v1069, %v1072
  %vm1074 = vweird.f32 %v1065
  %vm1075 = vweird.f32 %v1069
  %vm1076 = vmor %vm1074, %vm1075
  %v1077 = vsel %vm1076, %v1069, %v1073
  %v1078 = vand.u32 2147483647, %v1065
  %vm1079 = vcmp.eq.f32.partialorder %v1078, 8.507059e+37
  %v1080 = vand.u32 %v1065, 2147483648
  %v1081 = vor.u32 1.1754944e-38, %v1080
  %v1082 = vsel %vm1079, %v1081, %v1077
  %v1083 = vmul.f32 %v1056, %v1082
  %v1084 = vmul.f32 %v1058, %v1082
  %v1085 = vrcp.pop %v1068
  %v1086 = vmul.f32 %v1068, %v1085
  %v1087 = vsub.f32 1.0, %v1086
  %v1088 = vmul.f32 %v1085, %v1087
  %v1089 = vadd.f32 %v1085, %v1088
  %vm1090 = vweird.f32 %v1068
  %vm1091 = vweird.f32 %v1085
  %vm1092 = vmor %vm1090, %vm1091
  %v1093 = vsel %vm1092, %v1085, %v1089
  %v1094 = vand.u32 2147483647, %v1068
  %vm1095 = vcmp.eq.f32.partialorder %v1094, 8.507059e+37
  %v1096 = vand.u32 %v1068, 2147483648
  %v1097 = vor.u32 1.1754944e-38, %v1096
  %v1098 = vsel %vm1095, %v1097, %v1093
  %v1099 = vmul.f32 %v1060, %v1098
  %v1100 = vmul.f32 %v1062, %v1098
  %v1101 = vpack.c.bf16 %v1099, %v1083
  %v1102 = vpack.c.bf16 %v1100, %v1084
  %1103 = vxpose.xlu0.b32.start [1/16] %v1083, 128
  %1104 = vxpose.xlu0.b32.cont [2/16] %v1099, 128
  %1105 = vxpose.xlu0.b32.cont [3/16] 0.0, 128
  %1106 = vxpose.xlu0.b32.cont [4/16] 0.0, 128
  %1107 = vxpose.xlu0.b32.cont [5/16] 0.0, 128
  %1108 = vxpose.xlu0.b32.cont [6/16] 0.0, 128
  %1109 = vxpose.xlu0.b32.cont [7/16] 0.0, 128
  %1110 = vxpose.xlu0.b32.cont [8/16] 0.0, 128
  %1111 = vxpose.xlu0.b32.cont [9/16] 0.0, 128
  %1112 = vxpose.xlu0.b32.cont [10/16] 0.0, 128
  %1113 = vxpose.xlu0.b32.cont [11/16] 0.0, 128
  %1114 = vxpose.xlu0.b32.cont [12/16] 0.0, 128
  %1115 = vxpose.xlu0.b32.cont [13/16] 0.0, 128
  %1116 = vxpose.xlu0.b32.cont [14/16] 0.0, 128
  %1117 = vxpose.xlu0.b32.cont [15/16] 0.0, 128
  %1118 = vxpose.xlu0.b32.end [16/16] 0.0, 128
  %v1119 = vpop.trf.xlu0
  %v1120 = vpop.trf.xlu0
  %v1121 = vpop.trf.xlu0
  %v1122 = vpop.trf.xlu0
  %v1123 = vpop.trf.xlu0
  %v1124 = vpop.trf.xlu0
  %v1125 = vpop.trf.xlu0
  %v1126 = vpop.trf.xlu0
  %v1127 = vpop.trf.xlu0
  %v1128 = vpop.trf.xlu0
  %v1129 = vpop.trf.xlu0
  %v1130 = vpop.trf.xlu0
  %v1131 = vpop.trf.xlu0
  %v1132 = vpop.trf.xlu0
  %v1133 = vpop.trf.xlu0
  %v1134 = vpop.trf.xlu0
  %1135 = vxpose.xlu0.b32.start [1/16] %v1084, 128
  %1136 = vxpose.xlu0.b32.cont [2/16] %v1100, 128
  %1137 = vxpose.xlu0.b32.cont [3/16] 0.0, 128
  %1138 = vxpose.xlu0.b32.cont [4/16] 0.0, 128
  %1139 = vxpose.xlu0.b32.cont [5/16] 0.0, 128
  %1140 = vxpose.xlu0.b32.cont [6/16] 0.0, 128
  %1141 = vxpose.xlu0.b32.cont [7/16] 0.0, 128
  %1142 = vxpose.xlu0.b32.cont [8/16] 0.0, 128
  %1143 = vxpose.xlu0.b32.cont [9/16] 0.0, 128
  %1144 = vxpose.xlu0.b32.cont [10/16] 0.0, 128
  %1145 = vxpose.xlu0.b32.cont [11/16] 0.0, 128
  %1146 = vxpose.xlu0.b32.cont [12/16] 0.0, 128
  %1147 = vxpose.xlu0.b32.cont [13/16] 0.0, 128
  %1148 = vxpose.xlu0.b32.cont [14/16] 0.0, 128
  %1149 = vxpose.xlu0.b32.cont [15/16] 0.0, 128
  %1150 = vxpose.xlu0.b32.end [16/16] 0.0, 128
  %v1151 = vpop.trf.xlu0
  %v1152 = vpop.trf.xlu0
  %v1153 = vpop.trf.xlu0
  %v1154 = vpop.trf.xlu0
  %v1155 = vpop.trf.xlu0
  %v1156 = vpop.trf.xlu0
  %v1157 = vpop.trf.xlu0
  %v1158 = vpop.trf.xlu0
  %v1159 = vpop.trf.xlu0
  %v1160 = vpop.trf.xlu0
  %v1161 = vpop.trf.xlu0
  %v1162 = vpop.trf.xlu0
  %v1163 = vpop.trf.xlu0
  %v1164 = vpop.trf.xlu0
  %v1165 = vpop.trf.xlu0
  %v1166 = vpop.trf.xlu0
  %v1167 = vpack.c.bf16 %v1120, %v1119
  %v1168 = vpack.c.bf16 %v1122, %v1121
  %v1169 = vpack.c.bf16 %v1124, %v1123
  %v1170 = vpack.c.bf16 %v1126, %v1125
  %v1171 = vpack.c.bf16 %v1128, %v1127
  %v1172 = vpack.c.bf16 %v1130, %v1129
  %v1173 = vpack.c.bf16 %v1132, %v1131
  %v1174 = vpack.c.bf16 %v1134, %v1133
  %v1175 = vpack.c.bf16 %v1152, %v1151
  %v1176 = vpack.c.bf16 %v1154, %v1153
  %v1177 = vpack.c.bf16 %v1156, %v1155
  %v1178 = vpack.c.bf16 %v1158, %v1157
  %v1179 = vpack.c.bf16 %v1160, %v1159
  %v1180 = vpack.c.bf16 %v1162, %v1161
  %v1181 = vpack.c.bf16 %v1164, %v1163
  %v1182 = vpack.c.bf16 %v1166, %v1165
  %1183 = vmatpush.bf16.msra.mxu0 %v1174
  %1184 = vmatpush.bf16.msra.mxu0 %v1173
  %1185 = vmatpush.bf16.msra.mxu0 %v1172
  %1186 = vmatpush.bf16.msra.mxu0 %v1171
  %1187 = vmatpush.bf16.msra.mxu0 %v1170
  %1188 = vmatpush.bf16.msra.mxu0 %v1169
  %1189 = vmatpush.bf16.msra.mxu0 %v1168
  %1190 = vmatpush.bf16.msra.mxu0 %v1167
  %1191 = vmatmul.bf16.gmra.mxu0 %v1009
  %v1192 = vpop.f32.mrf.mxu0
  %v1193 = vadd.f32 0.0, %v1192
  %v1194 = vpop.f32.mrf.mxu0
  %v1195 = vadd.f32 0.0, %v1194
  %1196 = vmatmul.bf16.gmra.mxu0 %v1011
  %v1197 = vpop.f32.mrf.mxu0
  %v1198 = vadd.f32 0.0, %v1197
  %v1199 = vpop.f32.mrf.mxu0
  %v1200 = vadd.f32 0.0, %v1199
  %1201 = vdwg.mxu0
  %1202 = vmatpush.bf16.msra.mxu0 %v1182
  %1203 = vmatpush.bf16.msra.mxu0 %v1181
  %1204 = vmatpush.bf16.msra.mxu0 %v1180
  %1205 = vmatpush.bf16.msra.mxu0 %v1179
  %1206 = vmatpush.bf16.msra.mxu0 %v1178
  %1207 = vmatpush.bf16.msra.mxu0 %v1177
  %1208 = vmatpush.bf16.msra.mxu0 %v1176
  %1209 = vmatpush.bf16.msra.mxu0 %v1175
  %1210 = vmatmul.bf16.gmra.mxu0 %v1010
  %v1211 = vpop.f32.mrf.mxu0
  %v1212 = vadd.f32 %v1193, %v1211
  %v1213 = vpop.f32.mrf.mxu0
  %v1214 = vadd.f32 %v1195, %v1213
  %1215 = vmatmul.bf16.gmra.mxu0 %v1012
  %v1216 = vpop.f32.mrf.mxu0
  %v1217 = vadd.f32 %v1198, %v1216
  %v1218 = vpop.f32.mrf.mxu0
  %v1219 = vadd.f32 %v1200, %v1218
  %1220 = vdwg.mxu0
  %v1221 = vpack.c.bf16 %v1214, %v1212
  %v1222 = vpack.c.bf16 %v1219, %v1217
  %1223 = vmatpush.bf16.msra.mxu0 0
  %1224 = vmatpush.bf16.msra.mxu0 0
  %1225 = vmatpush.bf16.msra.mxu0 0
  %1226 = vmatpush.bf16.msra.mxu0 0
  %1227 = vmatpush.bf16.msra.mxu0 0
  %1228 = vmatpush.bf16.msra.mxu0 0
  %1229 = vmatpush.bf16.msra.mxu0 %v1222
  %1230 = vmatpush.bf16.msra.mxu0 %v1221
  %1231 = vmatmul.bf16.gmra.mxu0 %v595
  %v1232 = vpop.f32.mrf.mxu0
  %v1233 = vadd.f32 %v537, %v1232
  %v1234 = vpop.f32.mrf.mxu0
  %v1235 = vadd.f32 %v542, %v1234
  %1236 = vmatmul.bf16.gmra.mxu0 %v598
  %v1237 = vpop.f32.mrf.mxu0
  %v1238 = vadd.f32 %v547, %v1237
  %v1239 = vpop.f32.mrf.mxu0
  %v1240 = vadd.f32 %v552, %v1239
  %1241 = vmatmul.bf16.gmra.mxu0 %v601
  %v1242 = vpop.f32.mrf.mxu0
  %v1243 = vadd.f32 %v557, %v1242
  %v1244 = vpop.f32.mrf.mxu0
  %v1245 = vadd.f32 %v562, %v1244
  %1246 = vmatmul.bf16.gmra.mxu0 %v604
  %v1247 = vpop.f32.mrf.mxu0
  %v1248 = vadd.f32 %v567, %v1247
  %v1249 = vpop.f32.mrf.mxu0
  %v1250 = vadd.f32 %v572, %v1249
  %1251 = vdwg.mxu0
  %v1252 = vmax.f32 %v1233, 0.0
  %v1253 = vmax.f32 %v1235, 0.0
  %v1254 = vmax.f32 %v1238, 0.0
  %v1255 = vmax.f32 %v1240, 0.0
  %v1256 = vmax.f32 %v1243, 0.0
  %v1257 = vmax.f32 %v1245, 0.0
  %v1258 = vmax.f32 %v1248, 0.0
  %v1259 = vmax.f32 %v1250, 0.0
  %v1260 = vpack.c.bf16 %v1253, %v1252
  %v1261 = vpack.c.bf16 %v1255, %v1254
  %v1262 = vpack.c.bf16 %v1257, %v1256
  %v1263 = vpack.c.bf16 %v1259, %v1258
  %1264 = vmatpush.bf16.msra.mxu0 0
  %1265 = vmatpush.bf16.msra.mxu0 0
  %1266 = vmatpush.bf16.msra.mxu0 0
  %1267 = vmatpush.bf16.msra.mxu0 0
  %1268 = vmatpush.bf16.msra.mxu0 %v1263
  %1269 = vmatpush.bf16.msra.mxu0 %v1262
  %1270 = vmatpush.bf16.msra.mxu0 %v1261
  %1271 = vmatpush.bf16.msra.mxu0 %v1260
  %1272 = vmatmul.bf16.gmra.mxu0 %v659
  %v1273 = vpop.f32.mrf.mxu0
  %v1274 = vadd.f32 0.0, %v1273
  %v1275 = vpop.f32.mrf.mxu0
  %v1276 = vadd.f32 0.0, %v1275
  %1277 = vmatmul.bf16.gmra.mxu0 %v662
  %v1278 = vpop.f32.mrf.mxu0
  %v1279 = vadd.f32 0.0, %v1278
  %v1280 = vpop.f32.mrf.mxu0
  %v1281 = vadd.f32 0.0, %v1280
  %1282 = vdwg.mxu0
  %v1283 = vadd.f32 %v1212, %v1274
  %v1284 = vadd.f32 %v1214, %v1276
  %v1285 = vadd.f32 %v1217, %v1279
  %v1286 = vadd.f32 %v1219, %v1281
  %v1287 = vadd.f32 %v1283, %v690
  %v1288 = vadd.f32 %v1284, %v695
  %v1289 = vadd.f32 %v1285, %v700
  %v1290 = vadd.f32 %v1286, %v705
  %v1291 = vpack.c.bf16 %v1288, %v1287
  %v1292 = vpack.c.bf16 %v1290, %v1289
  %1293 = vmatpush.bf16.msra.mxu0 0
  %1294 = vmatpush.bf16.msra.mxu0 0
  %1295 = vmatpush.bf16.msra.mxu0 0
  %1296 = vmatpush.bf16.msra.mxu0 0
  %1297 = vmatpush.bf16.msra.mxu0 0
  %1298 = vmatpush.bf16.msra.mxu0 0
  %1299 = vmatpush.bf16.msra.mxu0 %v1292
  %1300 = vmatpush.bf16.msra.mxu0 %v1291
  %1301 = vmatmul.bf16.gmra.mxu0 %v774
  %v1302 = vpop.f32.mrf.mxu0
  %v1303 = vadd.f32 %v716, %v1302
  %v1304 = vpop.f32.mrf.mxu0
  %v1305 = vadd.f32 %v721, %v1304
  %1306 = vmatmul.bf16.gmra.mxu0 %v777
  %v1307 = vpop.f32.mrf.mxu0
  %v1308 = vadd.f32 %v726, %v1307
  %v1309 = vpop.f32.mrf.mxu0
  %v1310 = vadd.f32 %v731, %v1309
  %1311 = vmatmul.bf16.gmra.mxu0 %v780
  %v1312 = vpop.f32.mrf.mxu0
  %v1313 = vadd.f32 %v736, %v1312
  %v1314 = vpop.f32.mrf.mxu0
  %v1315 = vadd.f32 %v741, %v1314
  %1316 = vmatmul.bf16.gmra.mxu0 %v783
  %v1317 = vpop.f32.mrf.mxu0
  %v1318 = vadd.f32 %v746, %v1317
  %v1319 = vpop.f32.mrf.mxu0
  %v1320 = vadd.f32 %v751, %v1319
  %1321 = vdwg.mxu0
  %v1322 = vmax.f32 %v1303, 0.0
  %v1323 = vmax.f32 %v1305, 0.0
  %v1324 = vmax.f32 %v1308, 0.0
  %v1325 = vmax.f32 %v1310, 0.0
  %v1326 = vmax.f32 %v1313, 0.0
  %v1327 = vmax.f32 %v1315, 0.0
  %v1328 = vmax.f32 %v1318, 0.0
  %v1329 = vmax.f32 %v1320, 0.0
  %v1330 = vpack.c.bf16 %v1323, %v1322
  %v1331 = vpack.c.bf16 %v1325, %v1324
  %v1332 = vpack.c.bf16 %v1327, %v1326
  %v1333 = vpack.c.bf16 %v1329, %v1328
  %1334 = vmatpush.bf16.msra.mxu0 0
  %1335 = vmatpush.bf16.msra.mxu0 0
  %1336 = vmatpush.bf16.msra.mxu0 0
  %1337 = vmatpush.bf16.msra.mxu0 0
  %1338 = vmatpush.bf16.msra.mxu0 %v1333
  %1339 = vmatpush.bf16.msra.mxu0 %v1332
  %1340 = vmatpush.bf16.msra.mxu0 %v1331
  %1341 = vmatpush.bf16.msra.mxu0 %v1330
  %1342 = vmatmul.bf16.gmra.mxu0 %v837
  %v1343 = vpop.f32.mrf.mxu0
  %v1344 = vadd.f32 0.0, %v1343
  %v1345 = vpop.f32.mrf.mxu0
  %v1346 = vadd.f32 0.0, %v1345
  %1347 = vmatmul.bf16.gmra.mxu0 %v840
  %v1348 = vpop.f32.mrf.mxu0
  %v1349 = vadd.f32 0.0, %v1348
  %v1350 = vpop.f32.mrf.mxu0
  %v1351 = vadd.f32 0.0, %v1350
  %1352 = vdwg.mxu0
  %v1353 = vadd.f32 %v1287, %v1344
  %v1354 = vadd.f32 %v1288, %v1346
  %v1355 = vadd.f32 %v1289, %v1349
  %v1356 = vadd.f32 %v1290, %v1351
  %v1357 = vadd.f32 %v1353, %v868
  %v1358 = vadd.f32 %v1354, %v873
  %v1359 = vadd.f32 %v1355, %v878
  %v1360 = vadd.f32 %v1356, %v883
  %v1361 = vadd.f32 %v1287, %v1357
  %v1362 = vadd.f32 %v1288, %v1358
  %v1363 = vadd.f32 %v1289, %v1359
  %v1364 = vadd.f32 %v1290, %v1360
  %v1365 = vpack.c.bf16 %v1362, %v1361
  %v1366 = vpack.c.bf16 %v1364, %v1363
  %1367 = vmatpush.bf16.msra.mxu0 0
  %1368 = vmatpush.bf16.msra.mxu0 0
  %1369 = vmatpush.bf16.msra.mxu0 0
  %1370 = vmatpush.bf16.msra.mxu0 0
  %1371 = vmatpush.bf16.msra.mxu0 0
  %1372 = vmatpush.bf16.msra.mxu0 0
  %1373 = vmatpush.bf16.msra.mxu0 %v1366
  %1374 = vmatpush.bf16.msra.mxu0 %v1365
  %1375 = vmatmul.bf16.gmra.mxu0 %v906
  %v1376 = vpop.f32.mrf.mxu0
  %v1377 = vadd.f32 0.0, %v1376
  %v1378 = vpop.f32.mrf.mxu0
  %v1379 = vadd.f32 0.0, %v1378
  %1380 = vmatmul.bf16.gmra.mxu0 %v909
  %v1381 = vpop.f32.mrf.mxu0
  %v1382 = vadd.f32 0.0, %v1381
  %v1383 = vpop.f32.mrf.mxu0
  %v1384 = vadd.f32 0.0, %v1383
  %1385 = vdwg.mxu0
  %v1386 = vpack.c.bf16 %v1379, %v1377
  %v1387 = vpack.c.bf16 %v1384, %v1382
  %v1389 = vsel %vm952, %v1386, 0
  %v1392 = vsel %vm952, %v1387, 0
  %1394 = vmatpush.bf16.msra.mxu0 0
  %1395 = vmatpush.bf16.msra.mxu0 0
  %1396 = vmatpush.bf16.msra.mxu0 0
  %1397 = vmatpush.bf16.msra.mxu0 0
  %1398 = vmatpush.bf16.msra.mxu0 0
  %1399 = vmatpush.bf16.msra.mxu0 0
  %1400 = vmatpush.bf16.msra.mxu0 0
  %1401 = vmatpush.bf16.msra.mxu0 %v1101
  %1402 = vmatmul.bf16.gmra.mxu0 %v1389
  %v1403 = vpop.f32.mrf.mxu0
  %v1404 = vadd.f32 %v935, %v1403
  %v1405 = vpop.f32.mrf.mxu0
  %v1406 = vadd.f32 %v940, %v1405
  %1407 = vmatmul.bf16.gmra.mxu0 %v1392
  %v1408 = vpop.f32.mrf.mxu0
  %v1409 = vadd.f32 %v945, %v1408
  %v1410 = vpop.f32.mrf.mxu0
  %v1411 = vadd.f32 %v950, %v1410
  %1412 = vdwg.mxu0
  %1413 = vmatpush.bf16.msra.mxu0 0
  %1414 = vmatpush.bf16.msra.mxu0 0
  %1415 = vmatpush.bf16.msra.mxu0 0
  %1416 = vmatpush.bf16.msra.mxu0 0
  %1417 = vmatpush.bf16.msra.mxu0 0
  %1418 = vmatpush.bf16.msra.mxu0 0
  %1419 = vmatpush.bf16.msra.mxu0 0
  %1420 = vmatpush.bf16.msra.mxu0 %v1102
  %1421 = vmatmul.bf16.gmra.mxu0 %v1389
  %v1422 = vpop.f32.mrf.mxu0
  %v1423 = vadd.f32 %v935, %v1422
  %v1424 = vpop.f32.mrf.mxu0
  %v1425 = vadd.f32 %v940, %v1424
  %1426 = vmatmul.bf16.gmra.mxu0 %v1392
  %v1427 = vpop.f32.mrf.mxu0
  %v1428 = vadd.f32 %v945, %v1427
  %v1429 = vpop.f32.mrf.mxu0
  %v1430 = vadd.f32 %v950, %v1429
  %1431 = vdwg.mxu0
  %v1432 = vmax.f32 %v1404, 0.0
  %v1433 = vmax.f32 %v1423, 0.0
  %v1434 = vmax.f32 %v1406, 0.0
  %v1435 = vmax.f32 %v1425, 0.0
  %v1436 = vmax.f32 %v1409, 0.0
  %v1437 = vmax.f32 %v1428, 0.0
  %v1438 = vmax.f32 %v1411, 0.0
  %v1439 = vmax.f32 %v1430, 0.0
  %v1440 = vpack.c.bf16 %v1433, %v1432
  %v1441 = vpack.c.bf16 %v1435, %v1434
  %v1442 = vpack.c.bf16 %v1437, %v1436
  %v1443 = vpack.c.bf16 %v1439, %v1438
  %v1448 = vunpack.c.l.b16 %v1005
  %v1449 = vunpack.c.h.b16 %v1005
  %v1450 = vunpack.c.l.b16 %v1006
  %v1451 = vunpack.c.h.b16 %v1006
  %v1452 = vunpack.c.l.b16 %v1007
  %v1453 = vunpack.c.h.b16 %v1007
  %v1454 = vunpack.c.l.b16 %v1008
  %v1455 = vunpack.c.h.b16 %v1008
  %v1456 = vpack.c.b16 %v1450, %v1448
  %v1457 = vpack.c.b16 %v1451, %v1449
  %v1458 = vpack.c.b16 %v1454, %v1452
  %v1459 = vpack.c.b16 %v1455, %v1453
  %v1468 = vunpack.c.l.b16 %v1440
  %v1469 = vunpack.c.h.b16 %v1440
  %v1470 = vunpack.c.l.b16 %v1441
  %v1471 = vunpack.c.h.b16 %v1441
  %v1472 = vunpack.c.l.b16 %v1442
  %v1473 = vunpack.c.h.b16 %v1442
  %v1474 = vunpack.c.l.b16 %v1443
  %v1475 = vunpack.c.h.b16 %v1443
  %v1476 = vpack.c.b16 %v1470, %v1468
  %v1477 = vpack.c.b16 %v1471, %v1469
  %v1478 = vpack.c.b16 %v1474, %v1472
  %v1479 = vpack.c.b16 %v1475, %v1473
  %1485 = vset.pattern.permute.xlu0 0
  %1486 = vperm.xlu0 %1485, %v78
  %v1487 = vpop.permute.xlu0 %1486
  %v1490 = vsel %vm320, %v45, 0
  %1492 = vmatpush.bf16.msra.mxu0 0
  %1493 = vmatpush.bf16.msra.mxu0 0
  %1494 = vmatpush.bf16.msra.mxu0 0
  %1495 = vmatpush.bf16.msra.mxu0 0
  %1496 = vmatpush.bf16.msra.mxu0 0
  %1497 = vmatpush.bf16.msra.mxu0 0
  %1498 = vmatpush.bf16.msra.mxu0 %v1458
  %1499 = vmatpush.bf16.msra.mxu0 %v1456
  %1500 = vmatmul.bf16.gmra.mxu0 %v1490
  %v1501 = vpop.f32.mrf.mxu0
  %v1502 = vadd.f32 %v1487, %v1501
  %v1503 = vpop.f32.mrf.mxu0
  %1504 = vdwg.mxu0
  %1505 = vmatpush.bf16.msra.mxu0 0
  %1506 = vmatpush.bf16.msra.mxu0 0
  %1507 = vmatpush.bf16.msra.mxu0 0
  %1508 = vmatpush.bf16.msra.mxu0 0
  %1509 = vmatpush.bf16.msra.mxu0 0
  %1510 = vmatpush.bf16.msra.mxu0 0
  %1511 = vmatpush.bf16.msra.mxu0 %v1459
  %1512 = vmatpush.bf16.msra.mxu0 %v1457
  %1513 = vmatmul.bf16.gmra.mxu0 %v1490
  %v1514 = vpop.f32.mrf.mxu0
  %v1515 = vadd.f32 %v1487, %v1514
  %v1516 = vpop.f32.mrf.mxu0
  %1517 = vdwg.mxu0
  %1518 = vmatpush.bf16.msra.mxu0 0
  %1519 = vmatpush.bf16.msra.mxu0 0
  %1520 = vmatpush.bf16.msra.mxu0 0
  %1521 = vmatpush.bf16.msra.mxu0 0
  %1522 = vmatpush.bf16.msra.mxu0 0
  %1523 = vmatpush.bf16.msra.mxu0 0
  %1524 = vmatpush.bf16.msra.mxu0 %v1478
  %1525 = vmatpush.bf16.msra.mxu0 %v1476
  %1526 = vmatmul.bf16.gmra.mxu0 %v1490
  %v1527 = vpop.f32.mrf.mxu0
  %v1528 = vadd.f32 %v1487, %v1527
  %v1529 = vpop.f32.mrf.mxu0
  %1530 = vdwg.mxu0
  %1531 = vmatpush.bf16.msra.mxu0 0
  %1532 = vmatpush.bf16.msra.mxu0 0
  %1533 = vmatpush.bf16.msra.mxu0 0
  %1534 = vmatpush.bf16.msra.mxu0 0
  %1535 = vmatpush.bf16.msra.mxu0 0
  %1536 = vmatpush.bf16.msra.mxu0 0
  %1537 = vmatpush.bf16.msra.mxu0 %v1479
  %1538 = vmatpush.bf16.msra.mxu0 %v1477
  %1539 = vmatmul.bf16.gmra.mxu0 %v1490
  %v1540 = vpop.f32.mrf.mxu0
  %v1541 = vadd.f32 %v1487, %v1540
  %v1542 = vpop.f32.mrf.mxu0
  %1543 = vdwg.mxu0
  %1544 = vst [vmem:[%s3] sm:$0xff] %v1502
  %1545 = vst [vmem:[%s3 + $0x8] sm:$0xff] %v1515
  %1546 = vst [vmem:[%s3 + $0x10] sm:$0xff] %v1528
  %1547 = vst [vmem:[%s3 + $0x18] sm:$0xff] %v1541
  // Predicated region
  $region14: #{forward.1} parent=0 // pred_check
    _
  $region15: #{forward.1} parent=0 // pred_check_branch
    %1549 = sbr.rel (0) target = $region17
  $region16: #{forward.1} parent=0 // pred_region
    _
  $region17: #{forward.1} parent=0 // pred_fallthru
    _
  // Predicated region
  $region18: #{forward.1} parent=0 // pred_check
    _
  $region19: #{forward.1} parent=0 // pred_check_branch
    %1551 = sbr.rel (0) target = $region21
  $region20: #{forward.1} parent=0 // pred_region
    _
  $region21: #{forward.1} parent=0 // pred_fallthru
    _

</llo_original>
